<compile_context>
chip_gen: v5e
topology: v5e:2x2
jax: 0.10.0
libtpu: 0.0.40
codegen_flags: <defaults>
</compile_context>

<pallas_src>
import jax
import jax.numpy as jnp
from jax.experimental import pallas as pl
from jax.experimental.pallas import tpu as pltpu

_NC_PAD = 128  # lane-dense padding for the classifier output


# ---------------------------------------------------------------------------
# Fused kernel: pixels -> clip feats -> embeddings -> hidden(tanh) -> logits.
# Everything (weights, biases, activations) is resident in VMEM; no grid.
# ---------------------------------------------------------------------------
def _fused_adapter_kernel(
    x_ref,              # (B, C*H*W)        f32   flattened images, lane-dense
    clip_w_ref,         # (C*H*W, clip_dim) bf16
    clip_b_ref,         # (1, clip_dim)     f32
    embed_w_ref,        # (clip_dim, H)     bf16
    embed_b_ref,        # (1, H)            f32
    llm_w_ref,          # (H, H)            bf16
    llm_b_ref,          # (1, H)            f32
    cls_w_ref,          # (H, _NC_PAD)      bf16  (zero-padded past num_classes)
    cls_b_ref,          # (1, _NC_PAD)      f32   (zero-padded past num_classes)
    hidden_ref,         # out: (B, H)       f32
    logits_ref,         # out: (B, _NC_PAD) f32
):
    x = x_ref[...]                                           # f32 pixels

    # torch: if images.max() <= 1.0: images = images * 255.0
    # (scale*x)@w == scale*(x@w): apply in the epilogue, once per output tile.
    scale = jnp.where(jnp.max(x) <= 1.0, 255.0, 1.0).astype(jnp.float32)

    # TODO(synk): pretrained CLIP ViT get_image_features() is not reproducible
    # in-kernel; a linear pixel->clip_dim projection stands in for it.
    clip_feats = (
        jnp.dot(x.astype(jnp.bfloat16), clip_w_ref[...],
                preferred_element_type=jnp.float32) * scale
        + clip_b_ref[...]
    )

    # TODO(synk): llm.get_input_embeddings() applied to float CLIP features has
    # no exact equivalent (nn.Embedding expects int ids); modeled as a linear map.
    emb = (
        jnp.dot(clip_feats.astype(jnp.bfloat16), embed_w_ref[...],
                preferred_element_type=jnp.float32)
        + embed_b_ref[...]
    )

    # TODO(synk): the pretrained HF AutoModel over the length-1 inputs_embeds
    # sequence is surrogate-modeled by a single dense+tanh block (token-0 state).
    hid = jnp.tanh(
        jnp.dot(emb.astype(jnp.bfloat16), llm_w_ref[...],
                preferred_element_type=jnp.float32)
        + llm_b_ref[...]
    )
    hidden_ref[...] = hid.astype(hidden_ref.dtype)

    # classifier = nn.Linear(hidden, num_classes), padded to 128 output lanes.
    logits = (
        jnp.dot(hid.astype(jnp.bfloat16), cls_w_ref[...],
                preferred_element_type=jnp.float32)
        + cls_b_ref[...]
    )
    logits_ref[...] = logits.astype(logits_ref.dtype)


# ---------------------------------------------------------------------------
# Surrogate parameters for the pretrained backbones + the real classifier.
# Weights are stored in bf16 (kernel-native MXU dtype); biases stay f32.
# ---------------------------------------------------------------------------
def init_llm_vision_adapter_params(key, *, image_shape=(3, 16, 16),
                                   clip_dim=512, hidden=256, num_classes=2):
    assert num_classes <= _NC_PAD
    c, h, w = image_shape
    in_dim = c * h * w
    ks = jax.random.split(key, 8)

    def dense(kw, kb, fan_in, fan_out, w_scale=None):
        if w_scale is None:
            w_scale = 1.0 / jnp.sqrt(fan_in)
        w_ = (jax.random.normal(kw, (fan_in, fan_out), jnp.float32) * w_scale
              ).astype(jnp.bfloat16)
        b_ = jax.random.normal(kb, (1, fan_out), jnp.float32) * 0.01
        return w_, b_

    p = {}
    # CLIP image-feature surrogate (scaled so [0,255] pixels give O(1) features).
    p["clip_w"], p["clip_b"] = dense(ks[0], ks[1], in_dim, clip_dim,
                                     w_scale=1.0 / (255.0 * jnp.sqrt(in_dim)))
    # llm.get_input_embeddings() surrogate (clip features -> LLM hidden space).
    p["embed_w"], p["embed_b"] = dense(ks[2], ks[3], clip_dim, hidden)
    # LLM block surrogate (length-1 sequence -> last_hidden_state[:, 0, :]).
    p["llm_w"], p["llm_b"] = dense(ks[4], ks[5], hidden, hidden)
    # Classifier head: exact nn.Linear(hidden, num_classes) equivalent.
    p["cls_w"], p["cls_b"] = dense(ks[6], ks[7], hidden, num_classes)
    # Lane-dense padded copies for the kernel (extra columns are exactly zero).
    p["cls_w_pad"] = jnp.pad(p["cls_w"], ((0, 0), (0, _NC_PAD - num_classes)))
    p["cls_b_pad"] = jnp.pad(p["cls_b"], ((0, 0), (0, _NC_PAD - num_classes)))
    p["num_classes"] = num_classes
    return p


# ---------------------------------------------------------------------------
# Forward pass (mirrors LLMVisionAdapter.forward / get_embeddings, use_clip=True).
# ---------------------------------------------------------------------------
def llm_vision_adapter_forward(images, params):
    if images.ndim != 4 or images.shape[1] != 3:
        raise ValueError("Images must be in [B, C, H, W] format with C=3")
    b = images.shape[0]
    hidden = params["llm_b"].shape[1]
    num_classes = params["num_classes"]

    # Lane-dense flatten: (B, C, H, W) -> (B, C*H*W); last dim multiple of 128.
    x = images.reshape(b, -1).astype(jnp.float32)

    vmem = pl.BlockSpec(memory_space=pltpu.MemorySpace.VMEM)
    hid, logits_pad = pl.pallas_call(
        _fused_adapter_kernel,
        out_shape=(
            jax.ShapeDtypeStruct((b, hidden), jnp.float32),
            jax.ShapeDtypeStruct((b, _NC_PAD), jnp.float32),
        ),
        in_specs=[vmem] * 9,
        out_specs=(vmem, vmem),
    )(
        x,
        params["clip_w"], params["clip_b"],
        params["embed_w"], params["embed_b"],
        params["llm_w"], params["llm_b"],
        params["cls_w_pad"], params["cls_b_pad"],
    )

    return {"logits": logits_pad[:, :num_classes], "embeddings": hid}


# ---------------------------------------------------------------------------
# Pure-JAX reference (same surrogate weights, f32 math) for self-checking.
# ---------------------------------------------------------------------------
def _reference_forward(images, params):
    b = images.shape[0]
    scale = jnp.where(jnp.max(images) <= 1.0, 255.0, 1.0)
    x = images.reshape(b, -1).astype(jnp.float32) * scale
    clip_feats = x @ params["clip_w"].astype(jnp.float32) + params["clip_b"]
    emb = clip_feats @ params["embed_w"].astype(jnp.float32) + params["embed_b"]
    last_hidden = jnp.tanh(emb @ params["llm_w"].astype(jnp.float32) + params["llm_b"])
    logits = last_hidden @ params["cls_w"].astype(jnp.float32) + params["cls_b"]
    return {"logits": logits, "embeddings": last_hidden}


if __name__ == "__main__":
    key = jax.random.PRNGKey(0)
    k_img, k_params = jax.random.split(key)

    # Small NCHW image batch in [0, 1) -> exercises the x255 rescale branch.
    images = jax.random.uniform(k_img, (2, 3, 16, 16), dtype=jnp.float32)
    params = init_llm_vision_adapter_params(
        k_params, image_shape=(3, 16, 16), clip_dim=512, hidden=256, num_classes=2
    )

    outputs = llm_vision_adapter_forward(images, params)
    logits = jax.block_until_ready(outputs["logits"])
    embeddings = jax.block_until_ready(outputs["embeddings"])

    assert logits.shape == (2, 2)
    assert embeddings.shape == (2, 256)

    ref = _reference_forward(images, params)
    assert bool(jnp.allclose(embeddings, ref["embeddings"], rtol=5e-2, atol=5e-2))
    assert bool(jnp.allclose(logits, ref["logits"], rtol=5e-2, atol=5e-2))

    print("KERNEL_OK")
</pallas_src>

<mosaic_0001>
module attributes {stable_mosaic.version = 11 : i64} {
  func.func @_fused_adapter_kernel(%arg0: memref<2x768xf32, #tpu.memory_space<vmem>>, %arg1: memref<768x512xbf16, #tpu.memory_space<vmem>>, %arg2: memref<1x512xf32, #tpu.memory_space<vmem>>, %arg3: memref<512x256xbf16, #tpu.memory_space<vmem>>, %arg4: memref<1x256xf32, #tpu.memory_space<vmem>>, %arg5: memref<256x256xbf16, #tpu.memory_space<vmem>>, %arg6: memref<1x256xf32, #tpu.memory_space<vmem>>, %arg7: memref<256x128xbf16, #tpu.memory_space<vmem>>, %arg8: memref<1x128xf32, #tpu.memory_space<vmem>>, %arg9: memref<2x256xf32, #tpu.memory_space<vmem>>, %arg10: memref<2x128xf32, #tpu.memory_space<vmem>>) attributes {dimension_semantics = [], scalar_prefetch = 0 : i64, scratch_operands = 0 : i64, tpu.core_type = #tpu.core_type<tc>} {
    %c0 = arith.constant 0 : index
    %c0_0 = arith.constant 0 : index
    %0 = vector.load %arg0[%c0, %c0_0] : memref<2x768xf32, #tpu.memory_space<vmem>>, vector<2x768xf32>
    %1 = vector.shape_cast %0 : vector<2x768xf32> to vector<1x2x768xf32>
    %cst = arith.constant dense<0xFF800000> : vector<1xf32>
    %2 = vector.multi_reduction <maximumf>, %1, %cst [1, 2] : vector<1x2x768xf32> to vector<1xf32>
    %3 = vector.shape_cast %2 : vector<1xf32> to vector<1x1x1xf32>
    %4 = vector.extract %3[0, 0, 0] : f32 from vector<1x1x1xf32>
    %cst_1 = arith.constant 1.000000e+00 : f32
    %5 = arith.cmpf ole, %4, %cst_1 : f32
    %cst_2 = arith.constant 2.550000e+02 : f32
    %cst_3 = arith.constant 1.000000e+00 : f32
    %6 = arith.select %5, %cst_2, %cst_3 : f32
    %7 = arith.truncf %0 : vector<2x768xf32> to vector<2x768xbf16>
    %c0_4 = arith.constant 0 : index
    %c0_5 = arith.constant 0 : index
    %8 = vector.load %arg1[%c0_4, %c0_5] : memref<768x512xbf16, #tpu.memory_space<vmem>>, vector<768x512xbf16>
    %cst_6 = arith.constant dense<0.000000e+00> : vector<2x512xf32>
    %9 = tpu.matmul %7, %8, %cst_6 {dimension_numbers = #tpu.dot_dimension_numbers<[1], [0], [0], [1], [0, 0, 1, 1], [], []>} : vector<2x768xbf16>, vector<768x512xbf16>, vector<2x512xf32> -> vector<2x512xf32>
    %10 = vector.broadcast %6 : f32 to vector<2x512xf32>
    %11 = arith.mulf %9, %10 : vector<2x512xf32>
    %c0_7 = arith.constant 0 : index
    %c0_8 = arith.constant 0 : index
    %12 = vector.load %arg2[%c0_7, %c0_8] : memref<1x512xf32, #tpu.memory_space<vmem>>, vector<1x512xf32>
    %13 = vector.broadcast %12 : vector<1x512xf32> to vector<2x512xf32>
    %14 = arith.addf %11, %13 : vector<2x512xf32>
    %15 = arith.truncf %14 : vector<2x512xf32> to vector<2x512xbf16>
    %c0_9 = arith.constant 0 : index
    %c0_10 = arith.constant 0 : index
    %16 = vector.load %arg3[%c0_9, %c0_10] : memref<512x256xbf16, #tpu.memory_space<vmem>>, vector<512x256xbf16>
    %cst_11 = arith.constant dense<0.000000e+00> : vector<2x256xf32>
    %17 = tpu.matmul %15, %16, %cst_11 {dimension_numbers = #tpu.dot_dimension_numbers<[1], [0], [0], [1], [0, 0, 1, 1], [], []>} : vector<2x512xbf16>, vector<512x256xbf16>, vector<2x256xf32> -> vector<2x256xf32>
    %c0_12 = arith.constant 0 : index
    %c0_13 = arith.constant 0 : index
    %18 = vector.load %arg4[%c0_12, %c0_13] : memref<1x256xf32, #tpu.memory_space<vmem>>, vector<1x256xf32>
    %19 = vector.broadcast %18 : vector<1x256xf32> to vector<2x256xf32>
    %20 = arith.addf %17, %19 : vector<2x256xf32>
    %21 = arith.truncf %20 : vector<2x256xf32> to vector<2x256xbf16>
    %c0_14 = arith.constant 0 : index
    %c0_15 = arith.constant 0 : index
    %22 = vector.load %arg5[%c0_14, %c0_15] : memref<256x256xbf16, #tpu.memory_space<vmem>>, vector<256x256xbf16>
    %cst_16 = arith.constant dense<0.000000e+00> : vector<2x256xf32>
    %23 = tpu.matmul %21, %22, %cst_16 {dimension_numbers = #tpu.dot_dimension_numbers<[1], [0], [0], [1], [0, 0, 1, 1], [], []>} : vector<2x256xbf16>, vector<256x256xbf16>, vector<2x256xf32> -> vector<2x256xf32>
    %c0_17 = arith.constant 0 : index
    %c0_18 = arith.constant 0 : index
    %24 = vector.load %arg6[%c0_17, %c0_18] : memref<1x256xf32, #tpu.memory_space<vmem>>, vector<1x256xf32>
    %25 = vector.broadcast %24 : vector<1x256xf32> to vector<2x256xf32>
    %26 = arith.addf %23, %25 : vector<2x256xf32>
    %27 = math.tanh %26 : vector<2x256xf32>
    %c0_19 = arith.constant 0 : index
    %c0_20 = arith.constant 0 : index
    %28 = vector.load %arg9[%c0_19, %c0_20] : memref<2x256xf32, #tpu.memory_space<vmem>>, vector<2x256xf32>
    tpu.vector_store %arg9[%c0_19, %c0_20], %27 {strides = array<i32>} : memref<2x256xf32, #tpu.memory_space<vmem>>, vector<2x256xf32>,
    %29 = arith.truncf %27 : vector<2x256xf32> to vector<2x256xbf16>
    %c0_21 = arith.constant 0 : index
    %c0_22 = arith.constant 0 : index
    %30 = vector.load %arg7[%c0_21, %c0_22] : memref<256x128xbf16, #tpu.memory_space<vmem>>, vector<256x128xbf16>
    %cst_23 = arith.constant dense<0.000000e+00> : vector<2x128xf32>
    %31 = tpu.matmul %29, %30, %cst_23 {dimension_numbers = #tpu.dot_dimension_numbers<[1], [0], [0], [1], [0, 0, 1, 1], [], []>} : vector<2x256xbf16>, vector<256x128xbf16>, vector<2x128xf32> -> vector<2x128xf32>
    %c0_24 = arith.constant 0 : index
    %c0_25 = arith.constant 0 : index
    %32 = vector.load %arg8[%c0_24, %c0_25] : memref<1x128xf32, #tpu.memory_space<vmem>>, vector<1x128xf32>
    %33 = vector.broadcast %32 : vector<1x128xf32> to vector<2x128xf32>
    %34 = arith.addf %31, %33 : vector<2x128xf32>
    %c0_26 = arith.constant 0 : index
    %c0_27 = arith.constant 0 : index
    %35 = vector.load %arg10[%c0_26, %c0_27] : memref<2x128xf32, #tpu.memory_space<vmem>>, vector<2x128xf32>
    tpu.vector_store %arg10[%c0_26, %c0_27], %34 {strides = array<i32>} : memref<2x128xf32, #tpu.memory_space<vmem>>, vector<2x128xf32>,
    return
  }
}

</mosaic_0001>

<llo_original>
// kernel: tpu_custom_call.1
$region0: #{tpu_custom_call.1}
  #allocation0 [shape = 'u32[]', space=smem, size = 0x4, offset = 0x4, fixed_abs, tag = 'smem constant byte address 0x4 - core index']
  #allocation1 [shape = 'u32[72,128]{1,0:T(1,128)}', space=vmem, size = 0x9000, scoped, tag = 'internal scratch']
  %s0 = inlined_call_operand.hbm [shape: f32[2,768], index: 0, kind: input, shape index: {}]
  %s1 = inlined_call_operand.hbm [shape: bf16[768,512], index: 1, kind: input, shape index: {}]
  %s2 = inlined_call_operand.hbm [shape: f32[1,512], index: 2, kind: input, shape index: {}]
  %s3 = inlined_call_operand.hbm [shape: bf16[512,256], index: 3, kind: input, shape index: {}]
  %s4 = inlined_call_operand.vmem [shape: f32[1,256], index: 4, kind: input, shape index: {}]
  %s5 = inlined_call_operand.hbm [shape: bf16[256,256], index: 5, kind: input, shape index: {}]
  %s6 = inlined_call_operand.vmem [shape: f32[1,256], index: 6, kind: input, shape index: {}]
  %s7 = inlined_call_operand.hbm [shape: bf16[256,128], index: 7, kind: input, shape index: {}]
  %s8 = inlined_call_operand.vmem [shape: f32[1,128], index: 8, kind: input, shape index: {}]
  %s9 = inlined_call_operand.hbm [shape: f32[2,256], index: 9, kind: output, shape index: {0}]
  %s10 = inlined_call_operand.hbm [shape: f32[2,128], index: 10, kind: output, shape index: {1}]
  %11 = xla_tuple %s9, %s10
  %s12 = sld [smem:[#allocation0]]
  $region78: #{tpu_custom_call.1} parent=0
    _
  %s14 = ssub.s32 1, %s12
  %s15 = scalar_select 0, %s14, %s12
  $region1: #{tpu_custom_call.1} parent=0
    #allocation2 [shape = 'u8[6144]{0}', space=vmem, size = 0x1800, scoped, tag = 'input window, operand 0, single buffered']
    #allocation3 [shape = 's32[1]{0}', space=sflag, size = 0x4, scoped, tag = 'scoped memory for tpu_custom_call.1']
    #allocation4 [shape = 's32[1]{0}', space=sflag, size = 0x4, scoped, tag = 'scoped memory for tpu_custom_call.1']
    #allocation5 [shape = 'u8[786432]{0}', space=vmem, size = 0xc0000, scoped, tag = 'input window, operand 1, single buffered']
    #allocation6 [shape = 's32[1]{0}', space=sflag, size = 0x4, scoped, tag = 'scoped memory for tpu_custom_call.1']
    #allocation7 [shape = 'u8[2048]{0}', space=vmem, size = 0x800, scoped, tag = 'input window, operand 2, single buffered']
    #allocation8 [shape = 'u8[262144]{0}', space=vmem, size = 0x40000, scoped, tag = 'input window, operand 3, single buffered']
    #allocation9 [shape = 's32[1]{0}', space=sflag, size = 0x4, scoped, tag = 'scoped memory for tpu_custom_call.1']
    #allocation10 [shape = 'u8[131072]{0}', space=vmem, size = 0x20000, scoped, tag = 'input window, operand 5, single buffered']
    #allocation11 [shape = 'u8[65536]{0}', space=vmem, size = 0x10000, scoped, tag = 'input window, operand 7, single buffered']
    #allocation12 [shape = 's32[1]{0}', space=sflag, size = 0x4, scoped, tag = 'scoped memory for tpu_custom_call.1']
    #allocation13 [shape = 'u8[2048]{0}', space=vmem, size = 0x800, scoped, tag = 'output window, operand 0, single buffered']
    #allocation14 [shape = 'u8[1024]{0}', space=vmem, size = 0x400, scoped, tag = 'output window, operand 1, single buffered']
    #allocation15 [shape = 's32[1]{0}', space=sflag, size = 0x4, scoped, tag = 'scoped memory for tpu_custom_call.1']
    %16 = vsyncpa [#allocation3], 0
    %17 = vsyncpa [#allocation6], 0
    %18 = vsyncpa [#allocation9], 0
    %19 = vsyncpa [#allocation12], 0
    %20 = vsyncpa [#allocation4], 0
    %21 = vsyncpa [#allocation15], 0
    // Predicated region
    $region2: #{tpu_custom_call.1} parent=1 // pred_check
      _
    $region3: #{tpu_custom_call.1} parent=1 // pred_check_branch
      %23 = sbr.rel (0) target = $region5
    $region4: #{tpu_custom_call.1} parent=1 // pred_region
      %25 = vsyncadd [#allocation3], 0
      %s27 = sshll.u32 %s0, 4
      %s28 = int_to_ptr.hbm [resolvable:$true] %s27
      %s29 = sshll.u32 [#allocation2], 4
      %s30 = int_to_ptr.vmem [resolvable:$true] %s29
      %32 = dma.hbm_to_vmem [thread:$0]  %s28, 192, %s30, [#allocation3]
    $region5: #{tpu_custom_call.1} parent=1 // pred_fallthru
      _
    // Predicated region
    $region6: #{tpu_custom_call.1} parent=1 // pred_check
      _
    $region7: #{tpu_custom_call.1} parent=1 // pred_check_branch
      %34 = sbr.rel (0) target = $region9
    $region8: #{tpu_custom_call.1} parent=1 // pred_region
      %36 = vsyncadd [#allocation6], 0
      %s37 = sshll.u32 %s1, 4
      %s38 = int_to_ptr.hbm [resolvable:$true] %s37
      %s39 = sshll.u32 [#allocation5], 4
      %s40 = int_to_ptr.vmem [resolvable:$true] %s39
      %45 = dma.hbm_to_vmem [thread:$0]  %s38, 24576, %s40, [#allocation6], 256, 256, 16
    $region9: #{tpu_custom_call.1} parent=1 // pred_fallthru
      _
    // Predicated region
    $region10: #{tpu_custom_call.1} parent=1 // pred_check
      _
    $region11: #{tpu_custom_call.1} parent=1 // pred_check_branch
      %47 = sbr.rel (0) target = $region13
    $region12: #{tpu_custom_call.1} parent=1 // pred_region
      %49 = vsyncadd [#allocation6], 0
      %s51 = sshll.u32 %s2, 4
      %s52 = int_to_ptr.hbm [resolvable:$true] %s51
      %s53 = sshll.u32 [#allocation7], 4
      %s54 = int_to_ptr.vmem [resolvable:$true] %s53
      %56 = dma.hbm_to_vmem [thread:$0]  %s52, 64, %s54, [#allocation6]
    $region13: #{tpu_custom_call.1} parent=1 // pred_fallthru
      _
    // Predicated region
    $region14: #{tpu_custom_call.1} parent=1 // pred_check
      _
    $region15: #{tpu_custom_call.1} parent=1 // pred_check_branch
      %58 = sbr.rel (0) target = $region17
    $region16: #{tpu_custom_call.1} parent=1 // pred_region
      %60 = vsyncadd [#allocation9], 0
      %s61 = sshll.u32 %s3, 4
      %s62 = int_to_ptr.hbm [resolvable:$true] %s61
      %s63 = sshll.u32 [#allocation8], 4
      %s64 = int_to_ptr.vmem [resolvable:$true] %s63
      %69 = dma.hbm_to_vmem [thread:$0]  %s62, 8192, %s64, [#allocation9], 128, 128, 8
    $region17: #{tpu_custom_call.1} parent=1 // pred_fallthru
      _
    // Predicated region
    $region18: #{tpu_custom_call.1} parent=1 // pred_check
      _
    $region19: #{tpu_custom_call.1} parent=1 // pred_check_branch
      %71 = sbr.rel (0) target = $region21
    $region20: #{tpu_custom_call.1} parent=1 // pred_region
      _
    $region21: #{tpu_custom_call.1} parent=1 // pred_fallthru
      _
    // Predicated region
    $region22: #{tpu_custom_call.1} parent=1 // pred_check
      _
    $region23: #{tpu_custom_call.1} parent=1 // pred_check_branch
      %73 = sbr.rel (0) target = $region25
    $region24: #{tpu_custom_call.1} parent=1 // pred_region
      %75 = vsyncadd [#allocation9], 0
      %s76 = sshll.u32 %s5, 4
      %s77 = int_to_ptr.hbm [resolvable:$true] %s76
      %s78 = sshll.u32 [#allocation10], 4
      %s79 = int_to_ptr.vmem [resolvable:$true] %s78
      %84 = dma.hbm_to_vmem [thread:$0]  %s77, 4096, %s79, [#allocation9], 128, 128, 8
    $region25: #{tpu_custom_call.1} parent=1 // pred_fallthru
      _
    // Predicated region
    $region26: #{tpu_custom_call.1} parent=1 // pred_check
      _
    $region27: #{tpu_custom_call.1} parent=1 // pred_check_branch
      %86 = sbr.rel (0) target = $region29
    $region28: #{tpu_custom_call.1} parent=1 // pred_region
      _
    $region29: #{tpu_custom_call.1} parent=1 // pred_fallthru
      _
    // Predicated region
    $region30: #{tpu_custom_call.1} parent=1 // pred_check
      _
    $region31: #{tpu_custom_call.1} parent=1 // pred_check_branch
      %88 = sbr.rel (0) target = $region33
    $region32: #{tpu_custom_call.1} parent=1 // pred_region
      %90 = vsyncadd [#allocation12], 0
      %s91 = sshll.u32 %s7, 4
      %s92 = int_to_ptr.hbm [resolvable:$true] %s91
      %s93 = sshll.u32 [#allocation11], 4
      %s94 = int_to_ptr.vmem [resolvable:$true] %s93
      %99 = dma.hbm_to_vmem [thread:$0]  %s92, 2048, %s94, [#allocation12], 64, 64, 4
    $region33: #{tpu_custom_call.1} parent=1 // pred_fallthru
      _
    // Predicated region
    $region34: #{tpu_custom_call.1} parent=1 // pred_check
      _
    $region35: #{tpu_custom_call.1} parent=1 // pred_check_branch
      %101 = sbr.rel (0) target = $region37
    $region36: #{tpu_custom_call.1} parent=1 // pred_region
      _
    $region37: #{tpu_custom_call.1} parent=1 // pred_fallthru
      _
    // Predicated region
    $region38: #{tpu_custom_call.1} parent=1 // pred_check
      _
    $region39: #{tpu_custom_call.1} parent=1 // pred_check_branch
      %103 = sbr.rel (0) target = $region41
    $region40: #{tpu_custom_call.1} parent=1 // pred_region
      %105 = dma.done [#allocation3], 192
    $region41: #{tpu_custom_call.1} parent=1 // pred_fallthru
      _
    // Predicated region
    $region42: #{tpu_custom_call.1} parent=1 // pred_check
      _
    $region43: #{tpu_custom_call.1} parent=1 // pred_check_branch
      %107 = sbr.rel (0) target = $region45
    $region44: #{tpu_custom_call.1} parent=1 // pred_region
      %109 = dma.done [#allocation6], 24576
    $region45: #{tpu_custom_call.1} parent=1 // pred_fallthru
      _
    // Predicated region
    $region46: #{tpu_custom_call.1} parent=1 // pred_check
      _
    $region47: #{tpu_custom_call.1} parent=1 // pred_check_branch
      %111 = sbr.rel (0) target = $region49
    $region48: #{tpu_custom_call.1} parent=1 // pred_region
      %113 = dma.done [#allocation6], 64
    $region49: #{tpu_custom_call.1} parent=1 // pred_fallthru
      _
    // Predicated region
    $region50: #{tpu_custom_call.1} parent=1 // pred_check
      _
    $region51: #{tpu_custom_call.1} parent=1 // pred_check_branch
      %115 = sbr.rel (0) target = $region53
    $region52: #{tpu_custom_call.1} parent=1 // pred_region
      %117 = dma.done [#allocation9], 8192
    $region53: #{tpu_custom_call.1} parent=1 // pred_fallthru
      _
    // Predicated region
    $region54: #{tpu_custom_call.1} parent=1 // pred_check
      _
    $region55: #{tpu_custom_call.1} parent=1 // pred_check_branch
      %119 = sbr.rel (0) target = $region57
    $region56: #{tpu_custom_call.1} parent=1 // pred_region
      %121 = dma.done [#allocation9], 4096
    $region57: #{tpu_custom_call.1} parent=1 // pred_fallthru
      _
    // Predicated region
    $region58: #{tpu_custom_call.1} parent=1 // pred_check
      _
    $region59: #{tpu_custom_call.1} parent=1 // pred_check_branch
      %123 = sbr.rel (0) target = $region61
    $region60: #{tpu_custom_call.1} parent=1 // pred_region
      %125 = dma.done [#allocation12], 2048
    $region61: #{tpu_custom_call.1} parent=1 // pred_fallthru
      _
    %v126 = vld [vmem:[#allocation2] sm:$0xff]
    %v127 = vld [vmem:[#allocation2 + $0x8] sm:$0xf]
    %130 = vst [vmem:[#allocation1] ss:$4 sm:$0xff] %v126
    %s131 = scalar_lea.vmem [#allocation1], 32
    %132 = vst [vmem:[%s131] ss:$4 sm:$0xff] %v127
    %v133 = vld.sshfl [vmem:[#allocation1] sm:$0xff pattern:$0x73625140]
    %v134 = vld.sshfl [vmem:[#allocation1 + $0x8] sm:$0xff pattern:$0x73625140]
    %v135 = vld.sshfl [vmem:[#allocation1 + $0x10] sm:$0xff pattern:$0x73625140]
    %v136 = vld.sshfl [vmem:[#allocation1 + $0x18] sm:$0xff pattern:$0x73625140]
    %v137 = vld.sshfl [vmem:[#allocation1 + $0x20] sm:$0xff pattern:$0x73625140]
    %v138 = vld.sshfl [vmem:[#allocation1 + $0x28] sm:$0xff pattern:$0x73625140]
    %vm145 = vcmask 1041408
    %v146 = vsel %vm145, %v133, -inf
    %v147 = vsel %vm145, %v134, -inf
    %v148 = vsel %vm145, %v135, -inf
    %v149 = vsel %vm145, %v136, -inf
    %v150 = vsel %vm145, %v137, -inf
    %v151 = vmax.f32 %v146, %v150
    %v152 = vsel %vm145, %v138, -inf
    %v153 = vmax.f32 %v147, %v152
    %v154 = vmax.f32 %v151, %v153
    %v155 = vmax.f32 %v148, %v149
    %v156 = vmax.f32 %v154, %v155
    %157 = vmax.xlane.f32.xlu0 %v156
    %v158 = vpop.xlane.xlu0 %157
    %v159 = vrot.slane %v158, 4
    %v160 = vmax.f32 %v158, %v159
    %v161 = vrot.slane %v160, 2
    %v162 = vmax.f32 %v160, %v161
    %v163 = vrot.slane %v162, 1
    %v164 = vmax.f32 %v162, %v163
    %s165 = vtos %v164
    %p166 = scmp.le.f32.partialorder %s165, 1.0
    %s167 = scalar_select %p166, 255.0, 1.0
    %168 = vst [vmem:[#allocation1] ss:$4 sm:$0xff] %v126
    %s169 = scalar_lea.vmem [#allocation1], 32
    %170 = vst [vmem:[%s169] ss:$4 sm:$0xff] %v127
    %v171 = vld.sshfl [vmem:[#allocation1] sm:$0xff pattern:$0x73625140]
    %v172 = vld.sshfl [vmem:[#allocation1 + $0x8] sm:$0xff pattern:$0x73625140]
    %v173 = vld.sshfl [vmem:[#allocation1 + $0x10] sm:$0xff pattern:$0x73625140]
    %v174 = vld.sshfl [vmem:[#allocation1 + $0x18] sm:$0xff pattern:$0x73625140]
    %v175 = vld.sshfl [vmem:[#allocation1 + $0x20] sm:$0xff pattern:$0x73625140]
    %v176 = vld.sshfl [vmem:[#allocation1 + $0x28] sm:$0xff pattern:$0x73625140]
    %v183 = vpack.c.bf16 %v171, %v171
    %v184 = vpack.c.bf16 %v172, %v172
    %v185 = vpack.c.bf16 %v173, %v173
    %v186 = vpack.c.bf16 %v174, %v174
    %v187 = vpack.c.bf16 %v175, %v175
    %v188 = vpack.c.bf16 %v176, %v176
    %v189 = vld [vmem:[#allocation5] sm:$0xff]
    %v190 = vld [vmem:[#allocation5 + $0x8] sm:$0xff]
    %v191 = vld [vmem:[#allocation5 + $0x10] sm:$0xff]
    %v192 = vld [vmem:[#allocation5 + $0x18] sm:$0xff]
    %v193 = vld [vmem:[#allocation5 + $0x20] sm:$0xff]
    %v194 = vld [vmem:[#allocation5 + $0x28] sm:$0xff]
    %v195 = vld [vmem:[#allocation5 + $0x30] sm:$0xff]
    %v196 = vld [vmem:[#allocation5 + $0x38] sm:$0xff]
    %v197 = vld [vmem:[#allocation5 + $0x40] sm:$0xff]
    %v198 = vld [vmem:[#allocation5 + $0x48] sm:$0xff]
    %v199 = vld [vmem:[#allocation5 + $0x50] sm:$0xff]
    %v200 = vld [vmem:[#allocation5 + $0x58] sm:$0xff]
    %v201 = vld [vmem:[#allocation5 + $0x60] sm:$0xff]
    %v202 = vld [vmem:[#allocation5 + $0x68] sm:$0xff]
    %v203 = vld [vmem:[#allocation5 + $0x70] sm:$0xff]
    %v204 = vld [vmem:[#allocation5 + $0x78] sm:$0xff]
    %v205 = vld [vmem:[#allocation5 + $0x80] sm:$0xff]
    %v206 = vld [vmem:[#allocation5 + $0x88] sm:$0xff]
    %v207 = vld [vmem:[#allocation5 + $0x90] sm:$0xff]
    %v208 = vld [vmem:[#allocation5 + $0x98] sm:$0xff]
    %v209 = vld [vmem:[#allocation5 + $0xa0] sm:$0xff]
    %v210 = vld [vmem:[#allocation5 + $0xa8] sm:$0xff]
    %v211 = vld [vmem:[#allocation5 + $0xb0] sm:$0xff]
    %v212 = vld [vmem:[#allocation5 + $0xb8] sm:$0xff]
    %v213 = vld [vmem:[#allocation5 + $0xc0] sm:$0xff]
    %v214 = vld [vmem:[#allocation5 + $0xc8] sm:$0xff]
    %v215 = vld [vmem:[#allocation5 + $0xd0] sm:$0xff]
    %v216 = vld [vmem:[#allocation5 + $0xd8] sm:$0xff]
    %v217 = vld [vmem:[#allocation5 + $0xe0] sm:$0xff]
    %v218 = vld [vmem:[#allocation5 + $0xe8] sm:$0xff]
    %v219 = vld [vmem:[#allocation5 + $0xf0] sm:$0xff]
    %v220 = vld [vmem:[#allocation5 + $0xf8] sm:$0xff]
    %v221 = vld [vmem:[#allocation5 + $0x100] sm:$0xff]
    %v222 = vld [vmem:[#allocation5 + $0x108] sm:$0xff]
    %v223 = vld [vmem:[#allocation5 + $0x110] sm:$0xff]
    %v224 = vld [vmem:[#allocation5 + $0x118] sm:$0xff]
    %v225 = vld [vmem:[#allocation5 + $0x120] sm:$0xff]
    %v226 = vld [vmem:[#allocation5 + $0x128] sm:$0xff]
    %v227 = vld [vmem:[#allocation5 + $0x130] sm:$0xff]
    %v228 = vld [vmem:[#allocation5 + $0x138] sm:$0xff]
    %v229 = vld [vmem:[#allocation5 + $0x140] sm:$0xff]
    %v230 = vld [vmem:[#allocation5 + $0x148] sm:$0xff]
    %v231 = vld [vmem:[#allocation5 + $0x150] sm:$0xff]
    %v232 = vld [vmem:[#allocation5 + $0x158] sm:$0xff]
    %v233 = vld [vmem:[#allocation5 + $0x160] sm:$0xff]
    %v234 = vld [vmem:[#allocation5 + $0x168] sm:$0xff]
    %v235 = vld [vmem:[#allocation5 + $0x170] sm:$0xff]
    %v236 = vld [vmem:[#allocation5 + $0x178] sm:$0xff]
    %v237 = vld [vmem:[#allocation5 + $0x180] sm:$0xff]
    %v238 = vld [vmem:[#allocation5 + $0x188] sm:$0xff]
    %v239 = vld [vmem:[#allocation5 + $0x190] sm:$0xff]
    %v240 = vld [vmem:[#allocation5 + $0x198] sm:$0xff]
    %v241 = vld [vmem:[#allocation5 + $0x1a0] sm:$0xff]
    %v242 = vld [vmem:[#allocation5 + $0x1a8] sm:$0xff]
    %v243 = vld [vmem:[#allocation5 + $0x1b0] sm:$0xff]
    %v244 = vld [vmem:[#allocation5 + $0x1b8] sm:$0xff]
    %v245 = vld [vmem:[#allocation5 + $0x1c0] sm:$0xff]
    %v246 = vld [vmem:[#allocation5 + $0x1c8] sm:$0xff]
    %v247 = vld [vmem:[#allocation5 + $0x1d0] sm:$0xff]
    %v248 = vld [vmem:[#allocation5 + $0x1d8] sm:$0xff]
    %v249 = vld [vmem:[#allocation5 + $0x1e0] sm:$0xff]
    %v250 = vld [vmem:[#allocation5 + $0x1e8] sm:$0xff]
    %v251 = vld [vmem:[#allocation5 + $0x1f0] sm:$0xff]
    %v252 = vld [vmem:[#allocation5 + $0x1f8] sm:$0xff]
    %v253 = vld [vmem:[#allocation5 + $0x200] sm:$0xff]
    %v254 = vld [vmem:[#allocation5 + $0x208] sm:$0xff]
    %v255 = vld [vmem:[#allocation5 + $0x210] sm:$0xff]
    %v256 = vld [vmem:[#allocation5 + $0x218] sm:$0xff]
    %v257 = vld [vmem:[#allocation5 + $0x220] sm:$0xff]
    %v258 = vld [vmem:[#allocation5 + $0x228] sm:$0xff]
    %v259 = vld [vmem:[#allocation5 + $0x230] sm:$0xff]
    %v260 = vld [vmem:[#allocation5 + $0x238] sm:$0xff]
    %v261 = vld [vmem:[#allocation5 + $0x240] sm:$0xff]
    %v262 = vld [vmem:[#allocation5 + $0x248] sm:$0xff]
    %v263 = vld [vmem:[#allocation5 + $0x250] sm:$0xff]
    %v264 = vld [vmem:[#allocation5 + $0x258] sm:$0xff]
    %v265 = vld [vmem:[#allocation5 + $0x260] sm:$0xff]
    %v266 = vld [vmem:[#allocation5 + $0x268] sm:$0xff]
    %v267 = vld [vmem:[#allocation5 + $0x270] sm:$0xff]
    %v268 = vld [vmem:[#allocation5 + $0x278] sm:$0xff]
    %v269 = vld [vmem:[#allocation5 + $0x280] sm:$0xff]
    %v270 = vld [vmem:[#allocation5 + $0x288] sm:$0xff]
    %v271 = vld [vmem:[#allocation5 + $0x290] sm:$0xff]
    %v272 = vld [vmem:[#allocation5 + $0x298] sm:$0xff]
    %v273 = vld [vmem:[#allocation5 + $0x2a0] sm:$0xff]
    %v274 = vld [vmem:[#allocation5 + $0x2a8] sm:$0xff]
    %v275 = vld [vmem:[#allocation5 + $0x2b0] sm:$0xff]
    %v276 = vld [vmem:[#allocation5 + $0x2b8] sm:$0xff]
    %v277 = vld [vmem:[#allocation5 + $0x2c0] sm:$0xff]
    %v278 = vld [vmem:[#allocation5 + $0x2c8] sm:$0xff]
    %v279 = vld [vmem:[#allocation5 + $0x2d0] sm:$0xff]
    %v280 = vld [vmem:[#allocation5 + $0x2d8] sm:$0xff]
    %v281 = vld [vmem:[#allocation5 + $0x2e0] sm:$0xff]
    %v282 = vld [vmem:[#allocation5 + $0x2e8] sm:$0xff]
    %v283 = vld [vmem:[#allocation5 + $0x2f0] sm:$0xff]
    %v284 = vld [vmem:[#allocation5 + $0x2f8] sm:$0xff]
    %v285 = vld [vmem:[#allocation5 + $0x300] sm:$0xff]
    %v286 = vld [vmem:[#allocation5 + $0x308] sm:$0xff]
    %v287 = vld [vmem:[#allocation5 + $0x310] sm:$0xff]
    %v288 = vld [vmem:[#allocation5 + $0x318] sm:$0xff]
    %v289 = vld [vmem:[#allocation5 + $0x320] sm:$0xff]
    %v290 = vld [vmem:[#allocation5 + $0x328] sm:$0xff]
    %v291 = vld [vmem:[#allocation5 + $0x330] sm:$0xff]
    %v292 = vld [vmem:[#allocation5 + $0x338] sm:$0xff]
    %v293 = vld [vmem:[#allocation5 + $0x340] sm:$0xff]
    %v294 = vld [vmem:[#allocation5 + $0x348] sm:$0xff]
    %v295 = vld [vmem:[#allocation5 + $0x350] sm:$0xff]
    %v296 = vld [vmem:[#allocation5 + $0x358] sm:$0xff]
    %v297 = vld [vmem:[#allocation5 + $0x360] sm:$0xff]
    %v298 = vld [vmem:[#allocation5 + $0x368] sm:$0xff]
    %v299 = vld [vmem:[#allocation5 + $0x370] sm:$0xff]
    %v300 = vld [vmem:[#allocation5 + $0x378] sm:$0xff]
    %v301 = vld [vmem:[#allocation5 + $0x380] sm:$0xff]
    %v302 = vld [vmem:[#allocation5 + $0x388] sm:$0xff]
    %v303 = vld [vmem:[#allocation5 + $0x390] sm:$0xff]
    %v304 = vld [vmem:[#allocation5 + $0x398] sm:$0xff]
    %v305 = vld [vmem:[#allocation5 + $0x3a0] sm:$0xff]
    %v306 = vld [vmem:[#allocation5 + $0x3a8] sm:$0xff]
    %v307 = vld [vmem:[#allocation5 + $0x3b0] sm:$0xff]
    %v308 = vld [vmem:[#allocation5 + $0x3b8] sm:$0xff]
    %v309 = vld [vmem:[#allocation5 + $0x3c0] sm:$0xff]
    %v310 = vld [vmem:[#allocation5 + $0x3c8] sm:$0xff]
    %v311 = vld [vmem:[#allocation5 + $0x3d0] sm:$0xff]
    %v312 = vld [vmem:[#allocation5 + $0x3d8] sm:$0xff]
    %v313 = vld [vmem:[#allocation5 + $0x3e0] sm:$0xff]
    %v314 = vld [vmem:[#allocation5 + $0x3e8] sm:$0xff]
    %v315 = vld [vmem:[#allocation5 + $0x3f0] sm:$0xff]
    %v316 = vld [vmem:[#allocation5 + $0x3f8] sm:$0xff]
    %v317 = vld [vmem:[#allocation5 + $0x400] sm:$0xff]
    %v318 = vld [vmem:[#allocation5 + $0x408] sm:$0xff]
    %v319 = vld [vmem:[#allocation5 + $0x410] sm:$0xff]
    %v320 = vld [vmem:[#allocation5 + $0x418] sm:$0xff]
    %v321 = vld [vmem:[#allocation5 + $0x420] sm:$0xff]
    %v322 = vld [vmem:[#allocation5 + $0x428] sm:$0xff]
    %v323 = vld [vmem:[#allocation5 + $0x430] sm:$0xff]
    %v324 = vld [vmem:[#allocation5 + $0x438] sm:$0xff]
    %v325 = vld [vmem:[#allocation5 + $0x440] sm:$0xff]
    %v326 = vld [vmem:[#allocation5 + $0x448] sm:$0xff]
    %v327 = vld [vmem:[#allocation5 + $0x450] sm:$0xff]
    %v328 = vld [vmem:[#allocation5 + $0x458] sm:$0xff]
    %v329 = vld [vmem:[#allocation5 + $0x460] sm:$0xff]
    %v330 = vld [vmem:[#allocation5 + $0x468] sm:$0xff]
    %v331 = vld [vmem:[#allocation5 + $0x470] sm:$0xff]
    %v332 = vld [vmem:[#allocation5 + $0x478] sm:$0xff]
    %v333 = vld [vmem:[#allocation5 + $0x480] sm:$0xff]
    %v334 = vld [vmem:[#allocation5 + $0x488] sm:$0xff]
    %v335 = vld [vmem:[#allocation5 + $0x490] sm:$0xff]
    %v336 = vld [vmem:[#allocation5 + $0x498] sm:$0xff]
    %v337 = vld [vmem:[#allocation5 + $0x4a0] sm:$0xff]
    %v338 = vld [vmem:[#allocation5 + $0x4a8] sm:$0xff]
    %v339 = vld [vmem:[#allocation5 + $0x4b0] sm:$0xff]
    %v340 = vld [vmem:[#allocation5 + $0x4b8] sm:$0xff]
    %v341 = vld [vmem:[#allocation5 + $0x4c0] sm:$0xff]
    %v342 = vld [vmem:[#allocation5 + $0x4c8] sm:$0xff]
    %v343 = vld [vmem:[#allocation5 + $0x4d0] sm:$0xff]
    %v344 = vld [vmem:[#allocation5 + $0x4d8] sm:$0xff]
    %v345 = vld [vmem:[#allocation5 + $0x4e0] sm:$0xff]
    %v346 = vld [vmem:[#allocation5 + $0x4e8] sm:$0xff]
    %v347 = vld [vmem:[#allocation5 + $0x4f0] sm:$0xff]
    %v348 = vld [vmem:[#allocation5 + $0x4f8] sm:$0xff]
    %v349 = vld [vmem:[#allocation5 + $0x500] sm:$0xff]
    %v350 = vld [vmem:[#allocation5 + $0x508] sm:$0xff]
    %v351 = vld [vmem:[#allocation5 + $0x510] sm:$0xff]
    %v352 = vld [vmem:[#allocation5 + $0x518] sm:$0xff]
    %v353 = vld [vmem:[#allocation5 + $0x520] sm:$0xff]
    %v354 = vld [vmem:[#allocation5 + $0x528] sm:$0xff]
    %v355 = vld [vmem:[#allocation5 + $0x530] sm:$0xff]
    %v356 = vld [vmem:[#allocation5 + $0x538] sm:$0xff]
    %v357 = vld [vmem:[#allocation5 + $0x540] sm:$0xff]
    %v358 = vld [vmem:[#allocation5 + $0x548] sm:$0xff]
    %v359 = vld [vmem:[#allocation5 + $0x550] sm:$0xff]
    %v360 = vld [vmem:[#allocation5 + $0x558] sm:$0xff]
    %v361 = vld [vmem:[#allocation5 + $0x560] sm:$0xff]
    %v362 = vld [vmem:[#allocation5 + $0x568] sm:$0xff]
    %v363 = vld [vmem:[#allocation5 + $0x570] sm:$0xff]
    %v364 = vld [vmem:[#allocation5 + $0x578] sm:$0xff]
    %v365 = vld [vmem:[#allocation5 + $0x580] sm:$0xff]
    %v366 = vld [vmem:[#allocation5 + $0x588] sm:$0xff]
    %v367 = vld [vmem:[#allocation5 + $0x590] sm:$0xff]
    %v368 = vld [vmem:[#allocation5 + $0x598] sm:$0xff]
    %v369 = vld [vmem:[#allocation5 + $0x5a0] sm:$0xff]
    %v370 = vld [vmem:[#allocation5 + $0x5a8] sm:$0xff]
    %v371 = vld [vmem:[#allocation5 + $0x5b0] sm:$0xff]
    %v372 = vld [vmem:[#allocation5 + $0x5b8] sm:$0xff]
    %v373 = vld [vmem:[#allocation5 + $0x5c0] sm:$0xff]
    %v374 = vld [vmem:[#allocation5 + $0x5c8] sm:$0xff]
    %v375 = vld [vmem:[#allocation5 + $0x5d0] sm:$0xff]
    %v376 = vld [vmem:[#allocation5 + $0x5d8] sm:$0xff]
    %v377 = vld [vmem:[#allocation5 + $0x5e0] sm:$0xff]
    %v378 = vld [vmem:[#allocation5 + $0x5e8] sm:$0xff]
    %v379 = vld [vmem:[#allocation5 + $0x5f0] sm:$0xff]
    %v380 = vld [vmem:[#allocation5 + $0x5f8] sm:$0xff]
    %v573 = vunpack.c.l.b16 %v189
    %v574 = vunpack.c.h.b16 %v189
    %v575 = vunpack.c.l.b16 %v190
    %v576 = vunpack.c.h.b16 %v190
    %v577 = vunpack.c.l.b16 %v191
    %v578 = vunpack.c.h.b16 %v191
    %v579 = vunpack.c.l.b16 %v192
    %v580 = vunpack.c.h.b16 %v192
    %v581 = vunpack.c.l.b16 %v193
    %v582 = vunpack.c.h.b16 %v193
    %v583 = vunpack.c.l.b16 %v194
    %v584 = vunpack.c.h.b16 %v194
    %v585 = vunpack.c.l.b16 %v195
    %v586 = vunpack.c.h.b16 %v195
    %v587 = vunpack.c.l.b16 %v196
    %v588 = vunpack.c.h.b16 %v196
    %v589 = vunpack.c.l.b16 %v197
    %v590 = vunpack.c.h.b16 %v197
    %v591 = vunpack.c.l.b16 %v198
    %v592 = vunpack.c.h.b16 %v198
    %v593 = vunpack.c.l.b16 %v199
    %v594 = vunpack.c.h.b16 %v199
    %v595 = vunpack.c.l.b16 %v200
    %v596 = vunpack.c.h.b16 %v200
    %v597 = vunpack.c.l.b16 %v201
    %v598 = vunpack.c.h.b16 %v201
    %v599 = vunpack.c.l.b16 %v202
    %v600 = vunpack.c.h.b16 %v202
    %v601 = vunpack.c.l.b16 %v203
    %v602 = vunpack.c.h.b16 %v203
    %v603 = vunpack.c.l.b16 %v204
    %v604 = vunpack.c.h.b16 %v204
    %v605 = vunpack.c.l.b16 %v205
    %v606 = vunpack.c.h.b16 %v205
    %v607 = vunpack.c.l.b16 %v206
    %v608 = vunpack.c.h.b16 %v206
    %v609 = vunpack.c.l.b16 %v207
    %v610 = vunpack.c.h.b16 %v207
    %v611 = vunpack.c.l.b16 %v208
    %v612 = vunpack.c.h.b16 %v208
    %v613 = vunpack.c.l.b16 %v209
    %v614 = vunpack.c.h.b16 %v209
    %v615 = vunpack.c.l.b16 %v210
    %v616 = vunpack.c.h.b16 %v210
    %v617 = vunpack.c.l.b16 %v211
    %v618 = vunpack.c.h.b16 %v211
    %v619 = vunpack.c.l.b16 %v212
    %v620 = vunpack.c.h.b16 %v212
    %v621 = vunpack.c.l.b16 %v213
    %v622 = vunpack.c.h.b16 %v213
    %v623 = vunpack.c.l.b16 %v214
    %v624 = vunpack.c.h.b16 %v214
    %v625 = vunpack.c.l.b16 %v215
    %v626 = vunpack.c.h.b16 %v215
    %v627 = vunpack.c.l.b16 %v216
    %v628 = vunpack.c.h.b16 %v216
    %v629 = vunpack.c.l.b16 %v217
    %v630 = vunpack.c.h.b16 %v217
    %v631 = vunpack.c.l.b16 %v218
    %v632 = vunpack.c.h.b16 %v218
    %v633 = vunpack.c.l.b16 %v219
    %v634 = vunpack.c.h.b16 %v219
    %v635 = vunpack.c.l.b16 %v220
    %v636 = vunpack.c.h.b16 %v220
    %v637 = vunpack.c.l.b16 %v221
    %v638 = vunpack.c.h.b16 %v221
    %v639 = vunpack.c.l.b16 %v222
    %v640 = vunpack.c.h.b16 %v222
    %v641 = vunpack.c.l.b16 %v223
    %v642 = vunpack.c.h.b16 %v223
    %v643 = vunpack.c.l.b16 %v224
    %v644 = vunpack.c.h.b16 %v224
    %v645 = vunpack.c.l.b16 %v225
    %v646 = vunpack.c.h.b16 %v225
    %v647 = vunpack.c.l.b16 %v226
    %v648 = vunpack.c.h.b16 %v226
    %v649 = vunpack.c.l.b16 %v227
    %v650 = vunpack.c.h.b16 %v227
    %v651 = vunpack.c.l.b16 %v228
    %v652 = vunpack.c.h.b16 %v228
    %v653 = vunpack.c.l.b16 %v229
    %v654 = vunpack.c.h.b16 %v229
    %v655 = vunpack.c.l.b16 %v230
    %v656 = vunpack.c.h.b16 %v230
    %v657 = vunpack.c.l.b16 %v231
    %v658 = vunpack.c.h.b16 %v231
    %v659 = vunpack.c.l.b16 %v232
    %v660 = vunpack.c.h.b16 %v232
    %v661 = vunpack.c.l.b16 %v233
    %v662 = vunpack.c.h.b16 %v233
    %v663 = vunpack.c.l.b16 %v234
    %v664 = vunpack.c.h.b16 %v234
    %v665 = vunpack.c.l.b16 %v235
    %v666 = vunpack.c.h.b16 %v235
    %v667 = vunpack.c.l.b16 %v236
    %v668 = vunpack.c.h.b16 %v236
    %v669 = vunpack.c.l.b16 %v237
    %v670 = vunpack.c.h.b16 %v237
    %v671 = vunpack.c.l.b16 %v238
    %v672 = vunpack.c.h.b16 %v238
    %v673 = vunpack.c.l.b16 %v239
    %v674 = vunpack.c.h.b16 %v239
    %v675 = vunpack.c.l.b16 %v240
    %v676 = vunpack.c.h.b16 %v240
    %v677 = vunpack.c.l.b16 %v241
    %v678 = vunpack.c.h.b16 %v241
    %v679 = vunpack.c.l.b16 %v242
    %v680 = vunpack.c.h.b16 %v242
    %v681 = vunpack.c.l.b16 %v243
    %v682 = vunpack.c.h.b16 %v243
    %v683 = vunpack.c.l.b16 %v244
    %v684 = vunpack.c.h.b16 %v244
    %v685 = vunpack.c.l.b16 %v245
    %v686 = vunpack.c.h.b16 %v245
    %v687 = vunpack.c.l.b16 %v246
    %v688 = vunpack.c.h.b16 %v246
    %v689 = vunpack.c.l.b16 %v247
    %v690 = vunpack.c.h.b16 %v247
    %v691 = vunpack.c.l.b16 %v248
    %v692 = vunpack.c.h.b16 %v248
    %v693 = vunpack.c.l.b16 %v249
    %v694 = vunpack.c.h.b16 %v249
    %v695 = vunpack.c.l.b16 %v250
    %v696 = vunpack.c.h.b16 %v250
    %v697 = vunpack.c.l.b16 %v251
    %v698 = vunpack.c.h.b16 %v251
    %v699 = vunpack.c.l.b16 %v252
    %v700 = vunpack.c.h.b16 %v252
    %v701 = vunpack.c.l.b16 %v253
    %v702 = vunpack.c.h.b16 %v253
    %v703 = vunpack.c.l.b16 %v254
    %v704 = vunpack.c.h.b16 %v254
    %v705 = vunpack.c.l.b16 %v255
    %v706 = vunpack.c.h.b16 %v255
    %v707 = vunpack.c.l.b16 %v256
    %v708 = vunpack.c.h.b16 %v256
    %v709 = vunpack.c.l.b16 %v257
    %v710 = vunpack.c.h.b16 %v257
    %v711 = vunpack.c.l.b16 %v258
    %v712 = vunpack.c.h.b16 %v258
    %v713 = vunpack.c.l.b16 %v259
    %v714 = vunpack.c.h.b16 %v259
    %v715 = vunpack.c.l.b16 %v260
    %v716 = vunpack.c.h.b16 %v260
    %v717 = vunpack.c.l.b16 %v261
    %v718 = vunpack.c.h.b16 %v261
    %v719 = vunpack.c.l.b16 %v262
    %v720 = vunpack.c.h.b16 %v262
    %v721 = vunpack.c.l.b16 %v263
    %v722 = vunpack.c.h.b16 %v263
    %v723 = vunpack.c.l.b16 %v264
    %v724 = vunpack.c.h.b16 %v264
    %v725 = vunpack.c.l.b16 %v265
    %v726 = vunpack.c.h.b16 %v265
    %v727 = vunpack.c.l.b16 %v266
    %v728 = vunpack.c.h.b16 %v266
    %v729 = vunpack.c.l.b16 %v267
    %v730 = vunpack.c.h.b16 %v267
    %v731 = vunpack.c.l.b16 %v268
    %v732 = vunpack.c.h.b16 %v268
    %v733 = vunpack.c.l.b16 %v269
    %v734 = vunpack.c.h.b16 %v269
    %v735 = vunpack.c.l.b16 %v270
    %v736 = vunpack.c.h.b16 %v270
    %v737 = vunpack.c.l.b16 %v271
    %v738 = vunpack.c.h.b16 %v271
    %v739 = vunpack.c.l.b16 %v272
    %v740 = vunpack.c.h.b16 %v272
    %v741 = vunpack.c.l.b16 %v273
    %v742 = vunpack.c.h.b16 %v273
    %v743 = vunpack.c.l.b16 %v274
    %v744 = vunpack.c.h.b16 %v274
    %v745 = vunpack.c.l.b16 %v275
    %v746 = vunpack.c.h.b16 %v275
    %v747 = vunpack.c.l.b16 %v276
    %v748 = vunpack.c.h.b16 %v276
    %v749 = vunpack.c.l.b16 %v277
    %v750 = vunpack.c.h.b16 %v277
    %v751 = vunpack.c.l.b16 %v278
    %v752 = vunpack.c.h.b16 %v278
    %v753 = vunpack.c.l.b16 %v279
    %v754 = vunpack.c.h.b16 %v279
    %v755 = vunpack.c.l.b16 %v280
    %v756 = vunpack.c.h.b16 %v280
    %v757 = vunpack.c.l.b16 %v281
    %v758 = vunpack.c.h.b16 %v281
    %v759 = vunpack.c.l.b16 %v282
    %v760 = vunpack.c.h.b16 %v282
    %v761 = vunpack.c.l.b16 %v283
    %v762 = vunpack.c.h.b16 %v283
    %v763 = vunpack.c.l.b16 %v284
    %v764 = vunpack.c.h.b16 %v284
    %v765 = vunpack.c.l.b16 %v285
    %v766 = vunpack.c.h.b16 %v285
    %v767 = vunpack.c.l.b16 %v286
    %v768 = vunpack.c.h.b16 %v286
    %v769 = vunpack.c.l.b16 %v287
    %v770 = vunpack.c.h.b16 %v287
    %v771 = vunpack.c.l.b16 %v288
    %v772 = vunpack.c.h.b16 %v288
    %v773 = vunpack.c.l.b16 %v289
    %v774 = vunpack.c.h.b16 %v289
    %v775 = vunpack.c.l.b16 %v290
    %v776 = vunpack.c.h.b16 %v290
    %v777 = vunpack.c.l.b16 %v291
    %v778 = vunpack.c.h.b16 %v291
    %v779 = vunpack.c.l.b16 %v292
    %v780 = vunpack.c.h.b16 %v292
    %v781 = vunpack.c.l.b16 %v293
    %v782 = vunpack.c.h.b16 %v293
    %v783 = vunpack.c.l.b16 %v294
    %v784 = vunpack.c.h.b16 %v294
    %v785 = vunpack.c.l.b16 %v295
    %v786 = vunpack.c.h.b16 %v295
    %v787 = vunpack.c.l.b16 %v296
    %v788 = vunpack.c.h.b16 %v296
    %v789 = vunpack.c.l.b16 %v297
    %v790 = vunpack.c.h.b16 %v297
    %v791 = vunpack.c.l.b16 %v298
    %v792 = vunpack.c.h.b16 %v298
    %v793 = vunpack.c.l.b16 %v299
    %v794 = vunpack.c.h.b16 %v299
    %v795 = vunpack.c.l.b16 %v300
    %v796 = vunpack.c.h.b16 %v300
    %v797 = vunpack.c.l.b16 %v301
    %v798 = vunpack.c.h.b16 %v301
    %v799 = vunpack.c.l.b16 %v302
    %v800 = vunpack.c.h.b16 %v302
    %v801 = vunpack.c.l.b16 %v303
    %v802 = vunpack.c.h.b16 %v303
    %v803 = vunpack.c.l.b16 %v304
    %v804 = vunpack.c.h.b16 %v304
    %v805 = vunpack.c.l.b16 %v305
    %v806 = vunpack.c.h.b16 %v305
    %v807 = vunpack.c.l.b16 %v306
    %v808 = vunpack.c.h.b16 %v306
    %v809 = vunpack.c.l.b16 %v307
    %v810 = vunpack.c.h.b16 %v307
    %v811 = vunpack.c.l.b16 %v308
    %v812 = vunpack.c.h.b16 %v308
    %v813 = vunpack.c.l.b16 %v309
    %v814 = vunpack.c.h.b16 %v309
    %v815 = vunpack.c.l.b16 %v310
    %v816 = vunpack.c.h.b16 %v310
    %v817 = vunpack.c.l.b16 %v311
    %v818 = vunpack.c.h.b16 %v311
    %v819 = vunpack.c.l.b16 %v312
    %v820 = vunpack.c.h.b16 %v312
    %v821 = vunpack.c.l.b16 %v313
    %v822 = vunpack.c.h.b16 %v313
    %v823 = vunpack.c.l.b16 %v314
    %v824 = vunpack.c.h.b16 %v314
    %v825 = vunpack.c.l.b16 %v315
    %v826 = vunpack.c.h.b16 %v315
    %v827 = vunpack.c.l.b16 %v316
    %v828 = vunpack.c.h.b16 %v316
    %v829 = vunpack.c.l.b16 %v317
    %v830 = vunpack.c.h.b16 %v317
    %v831 = vunpack.c.l.b16 %v318
    %v832 = vunpack.c.h.b16 %v318
    %v833 = vunpack.c.l.b16 %v319
    %v834 = vunpack.c.h.b16 %v319
    %v835 = vunpack.c.l.b16 %v320
    %v836 = vunpack.c.h.b16 %v320
    %v837 = vunpack.c.l.b16 %v321
    %v838 = vunpack.c.h.b16 %v321
    %v839 = vunpack.c.l.b16 %v322
    %v840 = vunpack.c.h.b16 %v322
    %v841 = vunpack.c.l.b16 %v323
    %v842 = vunpack.c.h.b16 %v323
    %v843 = vunpack.c.l.b16 %v324
    %v844 = vunpack.c.h.b16 %v324
    %v845 = vunpack.c.l.b16 %v325
    %v846 = vunpack.c.h.b16 %v325
    %v847 = vunpack.c.l.b16 %v326
    %v848 = vunpack.c.h.b16 %v326
    %v849 = vunpack.c.l.b16 %v327
    %v850 = vunpack.c.h.b16 %v327
    %v851 = vunpack.c.l.b16 %v328
    %v852 = vunpack.c.h.b16 %v328
    %v853 = vunpack.c.l.b16 %v329
    %v854 = vunpack.c.h.b16 %v329
    %v855 = vunpack.c.l.b16 %v330
    %v856 = vunpack.c.h.b16 %v330
    %v857 = vunpack.c.l.b16 %v331
    %v858 = vunpack.c.h.b16 %v331
    %v859 = vunpack.c.l.b16 %v332
    %v860 = vunpack.c.h.b16 %v332
    %v861 = vunpack.c.l.b16 %v333
    %v862 = vunpack.c.h.b16 %v333
    %v863 = vunpack.c.l.b16 %v334
    %v864 = vunpack.c.h.b16 %v334
    %v865 = vunpack.c.l.b16 %v335
    %v866 = vunpack.c.h.b16 %v335
    %v867 = vunpack.c.l.b16 %v336
    %v868 = vunpack.c.h.b16 %v336
    %v869 = vunpack.c.l.b16 %v337
    %v870 = vunpack.c.h.b16 %v337
    %v871 = vunpack.c.l.b16 %v338
    %v872 = vunpack.c.h.b16 %v338
    %v873 = vunpack.c.l.b16 %v339
    %v874 = vunpack.c.h.b16 %v339
    %v875 = vunpack.c.l.b16 %v340
    %v876 = vunpack.c.h.b16 %v340
    %v877 = vunpack.c.l.b16 %v341
    %v878 = vunpack.c.h.b16 %v341
    %v879 = vunpack.c.l.b16 %v342
    %v880 = vunpack.c.h.b16 %v342
    %v881 = vunpack.c.l.b16 %v343
    %v882 = vunpack.c.h.b16 %v343
    %v883 = vunpack.c.l.b16 %v344
    %v884 = vunpack.c.h.b16 %v344
    %v885 = vunpack.c.l.b16 %v345
    %v886 = vunpack.c.h.b16 %v345
    %v887 = vunpack.c.l.b16 %v346
    %v888 = vunpack.c.h.b16 %v346
    %v889 = vunpack.c.l.b16 %v347
    %v890 = vunpack.c.h.b16 %v347
    %v891 = vunpack.c.l.b16 %v348
    %v892 = vunpack.c.h.b16 %v348
    %v893 = vunpack.c.l.b16 %v349
    %v894 = vunpack.c.h.b16 %v349
    %v895 = vunpack.c.l.b16 %v350
    %v896 = vunpack.c.h.b16 %v350
    %v897 = vunpack.c.l.b16 %v351
    %v898 = vunpack.c.h.b16 %v351
    %v899 = vunpack.c.l.b16 %v352
    %v900 = vunpack.c.h.b16 %v352
    %v901 = vunpack.c.l.b16 %v353
    %v902 = vunpack.c.h.b16 %v353
    %v903 = vunpack.c.l.b16 %v354
    %v904 = vunpack.c.h.b16 %v354
    %v905 = vunpack.c.l.b16 %v355
    %v906 = vunpack.c.h.b16 %v355
    %v907 = vunpack.c.l.b16 %v356
    %v908 = vunpack.c.h.b16 %v356
    %v909 = vunpack.c.l.b16 %v357
    %v910 = vunpack.c.h.b16 %v357
    %v911 = vunpack.c.l.b16 %v358
    %v912 = vunpack.c.h.b16 %v358
    %v913 = vunpack.c.l.b16 %v359
    %v914 = vunpack.c.h.b16 %v359
    %v915 = vunpack.c.l.b16 %v360
    %v916 = vunpack.c.h.b16 %v360
    %v917 = vunpack.c.l.b16 %v361
    %v918 = vunpack.c.h.b16 %v361
    %v919 = vunpack.c.l.b16 %v362
    %v920 = vunpack.c.h.b16 %v362
    %v921 = vunpack.c.l.b16 %v363
    %v922 = vunpack.c.h.b16 %v363
    %v923 = vunpack.c.l.b16 %v364
    %v924 = vunpack.c.h.b16 %v364
    %v925 = vunpack.c.l.b16 %v365
    %v926 = vunpack.c.h.b16 %v365
    %v927 = vunpack.c.l.b16 %v366
    %v928 = vunpack.c.h.b16 %v366
    %v929 = vunpack.c.l.b16 %v367
    %v930 = vunpack.c.h.b16 %v367
    %v931 = vunpack.c.l.b16 %v368
    %v932 = vunpack.c.h.b16 %v368
    %v933 = vunpack.c.l.b16 %v369
    %v934 = vunpack.c.h.b16 %v369
    %v935 = vunpack.c.l.b16 %v370
    %v936 = vunpack.c.h.b16 %v370
    %v937 = vunpack.c.l.b16 %v371
    %v938 = vunpack.c.h.b16 %v371
    %v939 = vunpack.c.l.b16 %v372
    %v940 = vunpack.c.h.b16 %v372
    %v941 = vunpack.c.l.b16 %v373
    %v942 = vunpack.c.h.b16 %v373
    %v943 = vunpack.c.l.b16 %v374
    %v944 = vunpack.c.h.b16 %v374
    %v945 = vunpack.c.l.b16 %v375
    %v946 = vunpack.c.h.b16 %v375
    %v947 = vunpack.c.l.b16 %v376
    %v948 = vunpack.c.h.b16 %v376
    %v949 = vunpack.c.l.b16 %v377
    %v950 = vunpack.c.h.b16 %v377
    %v951 = vunpack.c.l.b16 %v378
    %v952 = vunpack.c.h.b16 %v378
    %v953 = vunpack.c.l.b16 %v379
    %v954 = vunpack.c.h.b16 %v379
    %v955 = vunpack.c.l.b16 %v380
    %v956 = vunpack.c.h.b16 %v380
    %v957 = vpack.c.b16 %v577, %v573
    %v958 = vpack.c.b16 %v578, %v574
    %v959 = vpack.c.b16 %v579, %v575
    %v960 = vpack.c.b16 %v580, %v576
    %v961 = vpack.c.b16 %v585, %v581
    %v962 = vpack.c.b16 %v586, %v582
    %v963 = vpack.c.b16 %v587, %v583
    %v964 = vpack.c.b16 %v588, %v584
    %v965 = vpack.c.b16 %v593, %v589
    %v966 = vpack.c.b16 %v594, %v590
    %v967 = vpack.c.b16 %v595, %v591
    %v968 = vpack.c.b16 %v596, %v592
    %v969 = vpack.c.b16 %v601, %v597
    %v970 = vpack.c.b16 %v602, %v598
    %v971 = vpack.c.b16 %v603, %v599
    %v972 = vpack.c.b16 %v604, %v600
    %v973 = vpack.c.b16 %v609, %v605
    %v974 = vpack.c.b16 %v610, %v606
    %v975 = vpack.c.b16 %v611, %v607
    %v976 = vpack.c.b16 %v612, %v608
    %v977 = vpack.c.b16 %v617, %v613
    %v978 = vpack.c.b16 %v618, %v614
    %v979 = vpack.c.b16 %v619, %v615
    %v980 = vpack.c.b16 %v620, %v616
    %v981 = vpack.c.b16 %v625, %v621
    %v982 = vpack.c.b16 %v626, %v622
    %v983 = vpack.c.b16 %v627, %v623
    %v984 = vpack.c.b16 %v628, %v624
    %v985 = vpack.c.b16 %v633, %v629
    %v986 = vpack.c.b16 %v634, %v630
    %v987 = vpack.c.b16 %v635, %v631
    %v988 = vpack.c.b16 %v636, %v632
    %v989 = vpack.c.b16 %v641, %v637
    %v990 = vpack.c.b16 %v642, %v638
    %v991 = vpack.c.b16 %v643, %v639
    %v992 = vpack.c.b16 %v644, %v640
    %v993 = vpack.c.b16 %v649, %v645
    %v994 = vpack.c.b16 %v650, %v646
    %v995 = vpack.c.b16 %v651, %v647
    %v996 = vpack.c.b16 %v652, %v648
    %v997 = vpack.c.b16 %v657, %v653
    %v998 = vpack.c.b16 %v658, %v654
    %v999 = vpack.c.b16 %v659, %v655
    %v1000 = vpack.c.b16 %v660, %v656
    %v1001 = vpack.c.b16 %v665, %v661
    %v1002 = vpack.c.b16 %v666, %v662
    %v1003 = vpack.c.b16 %v667, %v663
    %v1004 = vpack.c.b16 %v668, %v664
    %v1005 = vpack.c.b16 %v673, %v669
    %v1006 = vpack.c.b16 %v674, %v670
    %v1007 = vpack.c.b16 %v675, %v671
    %v1008 = vpack.c.b16 %v676, %v672
    %v1009 = vpack.c.b16 %v681, %v677
    %v1010 = vpack.c.b16 %v682, %v678
    %v1011 = vpack.c.b16 %v683, %v679
    %v1012 = vpack.c.b16 %v684, %v680
    %v1013 = vpack.c.b16 %v689, %v685
    %v1014 = vpack.c.b16 %v690, %v686
    %v1015 = vpack.c.b16 %v691, %v687
    %v1016 = vpack.c.b16 %v692, %v688
    %v1017 = vpack.c.b16 %v697, %v693
    %v1018 = vpack.c.b16 %v698, %v694
    %v1019 = vpack.c.b16 %v699, %v695
    %v1020 = vpack.c.b16 %v700, %v696
    %v1021 = vpack.c.b16 %v705, %v701
    %v1022 = vpack.c.b16 %v706, %v702
    %v1023 = vpack.c.b16 %v707, %v703
    %v1024 = vpack.c.b16 %v708, %v704
    %v1025 = vpack.c.b16 %v713, %v709
    %v1026 = vpack.c.b16 %v714, %v710
    %v1027 = vpack.c.b16 %v715, %v711
    %v1028 = vpack.c.b16 %v716, %v712
    %v1029 = vpack.c.b16 %v721, %v717
    %v1030 = vpack.c.b16 %v722, %v718
    %v1031 = vpack.c.b16 %v723, %v719
    %v1032 = vpack.c.b16 %v724, %v720
    %v1033 = vpack.c.b16 %v729, %v725
    %v1034 = vpack.c.b16 %v730, %v726
    %v1035 = vpack.c.b16 %v731, %v727
    %v1036 = vpack.c.b16 %v732, %v728
    %v1037 = vpack.c.b16 %v737, %v733
    %v1038 = vpack.c.b16 %v738, %v734
    %v1039 = vpack.c.b16 %v739, %v735
    %v1040 = vpack.c.b16 %v740, %v736
    %v1041 = vpack.c.b16 %v745, %v741
    %v1042 = vpack.c.b16 %v746, %v742
    %v1043 = vpack.c.b16 %v747, %v743
    %v1044 = vpack.c.b16 %v748, %v744
    %v1045 = vpack.c.b16 %v753, %v749
    %v1046 = vpack.c.b16 %v754, %v750
    %v1047 = vpack.c.b16 %v755, %v751
    %v1048 = vpack.c.b16 %v756, %v752
    %v1049 = vpack.c.b16 %v761, %v757
    %v1050 = vpack.c.b16 %v762, %v758
    %v1051 = vpack.c.b16 %v763, %v759
    %v1052 = vpack.c.b16 %v764, %v760
    %v1053 = vpack.c.b16 %v769, %v765
    %v1054 = vpack.c.b16 %v770, %v766
    %v1055 = vpack.c.b16 %v771, %v767
    %v1056 = vpack.c.b16 %v772, %v768
    %v1057 = vpack.c.b16 %v777, %v773
    %v1058 = vpack.c.b16 %v778, %v774
    %v1059 = vpack.c.b16 %v779, %v775
    %v1060 = vpack.c.b16 %v780, %v776
    %v1061 = vpack.c.b16 %v785, %v781
    %v1062 = vpack.c.b16 %v786, %v782
    %v1063 = vpack.c.b16 %v787, %v783
    %v1064 = vpack.c.b16 %v788, %v784
    %v1065 = vpack.c.b16 %v793, %v789
    %v1066 = vpack.c.b16 %v794, %v790
    %v1067 = vpack.c.b16 %v795, %v791
    %v1068 = vpack.c.b16 %v796, %v792
    %v1069 = vpack.c.b16 %v801, %v797
    %v1070 = vpack.c.b16 %v802, %v798
    %v1071 = vpack.c.b16 %v803, %v799
    %v1072 = vpack.c.b16 %v804, %v800
    %v1073 = vpack.c.b16 %v809, %v805
    %v1074 = vpack.c.b16 %v810, %v806
    %v1075 = vpack.c.b16 %v811, %v807
    %v1076 = vpack.c.b16 %v812, %v808
    %v1077 = vpack.c.b16 %v817, %v813
    %v1078 = vpack.c.b16 %v818, %v814
    %v1079 = vpack.c.b16 %v819, %v815
    %v1080 = vpack.c.b16 %v820, %v816
    %v1081 = vpack.c.b16 %v825, %v821
    %v1082 = vpack.c.b16 %v826, %v822
    %v1083 = vpack.c.b16 %v827, %v823
    %v1084 = vpack.c.b16 %v828, %v824
    %v1085 = vpack.c.b16 %v833, %v829
    %v1086 = vpack.c.b16 %v834, %v830
    %v1087 = vpack.c.b16 %v835, %v831
    %v1088 = vpack.c.b16 %v836, %v832
    %v1089 = vpack.c.b16 %v841, %v837
    %v1090 = vpack.c.b16 %v842, %v838
    %v1091 = vpack.c.b16 %v843, %v839
    %v1092 = vpack.c.b16 %v844, %v840
    %v1093 = vpack.c.b16 %v849, %v845
    %v1094 = vpack.c.b16 %v850, %v846
    %v1095 = vpack.c.b16 %v851, %v847
    %v1096 = vpack.c.b16 %v852, %v848
    %v1097 = vpack.c.b16 %v857, %v853
    %v1098 = vpack.c.b16 %v858, %v854
    %v1099 = vpack.c.b16 %v859, %v855
    %v1100 = vpack.c.b16 %v860, %v856
    %v1101 = vpack.c.b16 %v865, %v861
    %v1102 = vpack.c.b16 %v866, %v862
    %v1103 = vpack.c.b16 %v867, %v863
    %v1104 = vpack.c.b16 %v868, %v864
    %v1105 = vpack.c.b16 %v873, %v869
    %v1106 = vpack.c.b16 %v874, %v870
    %v1107 = vpack.c.b16 %v875, %v871
    %v1108 = vpack.c.b16 %v876, %v872
    %v1109 = vpack.c.b16 %v881, %v877
    %v1110 = vpack.c.b16 %v882, %v878
    %v1111 = vpack.c.b16 %v883, %v879
    %v1112 = vpack.c.b16 %v884, %v880
    %v1113 = vpack.c.b16 %v889, %v885
    %v1114 = vpack.c.b16 %v890, %v886
    %v1115 = vpack.c.b16 %v891, %v887
    %v1116 = vpack.c.b16 %v892, %v888
    %v1117 = vpack.c.b16 %v897, %v893
    %v1118 = vpack.c.b16 %v898, %v894
    %v1119 = vpack.c.b16 %v899, %v895
    %v1120 = vpack.c.b16 %v900, %v896
    %v1121 = vpack.c.b16 %v905, %v901
    %v1122 = vpack.c.b16 %v906, %v902
    %v1123 = vpack.c.b16 %v907, %v903
    %v1124 = vpack.c.b16 %v908, %v904
    %v1125 = vpack.c.b16 %v913, %v909
    %v1126 = vpack.c.b16 %v914, %v910
    %v1127 = vpack.c.b16 %v915, %v911
    %v1128 = vpack.c.b16 %v916, %v912
    %v1129 = vpack.c.b16 %v921, %v917
    %v1130 = vpack.c.b16 %v922, %v918
    %v1131 = vpack.c.b16 %v923, %v919
    %v1132 = vpack.c.b16 %v924, %v920
    %v1133 = vpack.c.b16 %v929, %v925
    %v1134 = vpack.c.b16 %v930, %v926
    %v1135 = vpack.c.b16 %v931, %v927
    %v1136 = vpack.c.b16 %v932, %v928
    %v1137 = vpack.c.b16 %v937, %v933
    %v1138 = vpack.c.b16 %v938, %v934
    %v1139 = vpack.c.b16 %v939, %v935
    %v1140 = vpack.c.b16 %v940, %v936
    %v1141 = vpack.c.b16 %v945, %v941
    %v1142 = vpack.c.b16 %v946, %v942
    %v1143 = vpack.c.b16 %v947, %v943
    %v1144 = vpack.c.b16 %v948, %v944
    %v1145 = vpack.c.b16 %v953, %v949
    %v1146 = vpack.c.b16 %v954, %v950
    %v1147 = vpack.c.b16 %v955, %v951
    %v1148 = vpack.c.b16 %v956, %v952
    %1341 = vmatpush.bf16.msra.mxu0 %v985
    %1342 = vmatpush.bf16.msra.mxu0 %v981
    %1343 = vmatpush.bf16.msra.mxu0 %v977
    %1344 = vmatpush.bf16.msra.mxu0 %v973
    %1345 = vmatpush.bf16.msra.mxu0 %v969
    %1346 = vmatpush.bf16.msra.mxu0 %v965
    %1347 = vmatpush.bf16.msra.mxu0 %v961
    %1348 = vmatpush.bf16.msra.mxu0 %v957
    %1349 = vmatmul.bf16.gmra.mxu0 %v183
    %v1350 = vpop.f32.mrf.mxu0
    %v1351 = vadd.f32 0.0, %v1350
    %v1352 = vpop.f32.mrf.mxu0
    %1353 = vdwg.mxu0
    %1354 = vmatpush.bf16.msra.mxu0 %v1017
    %1355 = vmatpush.bf16.msra.mxu0 %v1013
    %1356 = vmatpush.bf16.msra.mxu0 %v1009
    %1357 = vmatpush.bf16.msra.mxu0 %v1005
    %1358 = vmatpush.bf16.msra.mxu0 %v1001
    %1359 = vmatpush.bf16.msra.mxu0 %v997
    %1360 = vmatpush.bf16.msra.mxu0 %v993
    %1361 = vmatpush.bf16.msra.mxu0 %v989
    %1362 = vmatmul.bf16.gmra.mxu0 %v184
    %v1363 = vpop.f32.mrf.mxu0
    %v1364 = vadd.f32 %v1351, %v1363
    %v1365 = vpop.f32.mrf.mxu0
    %1366 = vdwg.mxu0
    %1367 = vmatpush.bf16.msra.mxu0 %v1049
    %1368 = vmatpush.bf16.msra.mxu0 %v1045
    %1369 = vmatpush.bf16.msra.mxu0 %v1041
    %1370 = vmatpush.bf16.msra.mxu0 %v1037
    %1371 = vmatpush.bf16.msra.mxu0 %v1033
    %1372 = vmatpush.bf16.msra.mxu0 %v1029
    %1373 = vmatpush.bf16.msra.mxu0 %v1025
    %1374 = vmatpush.bf16.msra.mxu0 %v1021
    %1375 = vmatmul.bf16.gmra.mxu0 %v185
    %v1376 = vpop.f32.mrf.mxu0
    %v1377 = vadd.f32 %v1364, %v1376
    %v1378 = vpop.f32.mrf.mxu0
    %1379 = vdwg.mxu0
    %1380 = vmatpush.bf16.msra.mxu0 %v1081
    %1381 = vmatpush.bf16.msra.mxu0 %v1077
    %1382 = vmatpush.bf16.msra.mxu0 %v1073
    %1383 = vmatpush.bf16.msra.mxu0 %v1069
    %1384 = vmatpush.bf16.msra.mxu0 %v1065
    %1385 = vmatpush.bf16.msra.mxu0 %v1061
    %1386 = vmatpush.bf16.msra.mxu0 %v1057
    %1387 = vmatpush.bf16.msra.mxu0 %v1053
    %1388 = vmatmul.bf16.gmra.mxu0 %v186
    %v1389 = vpop.f32.mrf.mxu0
    %v1390 = vadd.f32 %v1377, %v1389
    %v1391 = vpop.f32.mrf.mxu0
    %1392 = vdwg.mxu0
    %1393 = vmatpush.bf16.msra.mxu0 %v1113
    %1394 = vmatpush.bf16.msra.mxu0 %v1109
    %1395 = vmatpush.bf16.msra.mxu0 %v1105
    %1396 = vmatpush.bf16.msra.mxu0 %v1101
    %1397 = vmatpush.bf16.msra.mxu0 %v1097
    %1398 = vmatpush.bf16.msra.mxu0 %v1093
    %1399 = vmatpush.bf16.msra.mxu0 %v1089
    %1400 = vmatpush.bf16.msra.mxu0 %v1085
    %1401 = vmatmul.bf16.gmra.mxu0 %v187
    %v1402 = vpop.f32.mrf.mxu0
    %v1403 = vadd.f32 %v1390, %v1402
    %v1404 = vpop.f32.mrf.mxu0
    %1405 = vdwg.mxu0
    %1406 = vmatpush.bf16.msra.mxu0 %v1145
    %1407 = vmatpush.bf16.msra.mxu0 %v1141
    %1408 = vmatpush.bf16.msra.mxu0 %v1137
    %1409 = vmatpush.bf16.msra.mxu0 %v1133
    %1410 = vmatpush.bf16.msra.mxu0 %v1129
    %1411 = vmatpush.bf16.msra.mxu0 %v1125
    %1412 = vmatpush.bf16.msra.mxu0 %v1121
    %1413 = vmatpush.bf16.msra.mxu0 %v1117
    %1414 = vmatmul.bf16.gmra.mxu0 %v188
    %v1415 = vpop.f32.mrf.mxu0
    %v1416 = vadd.f32 %v1403, %v1415
    %v1417 = vpop.f32.mrf.mxu0
    %1418 = vdwg.mxu0
    %1419 = vmatpush.bf16.msra.mxu0 %v986
    %1420 = vmatpush.bf16.msra.mxu0 %v982
    %1421 = vmatpush.bf16.msra.mxu0 %v978
    %1422 = vmatpush.bf16.msra.mxu0 %v974
    %1423 = vmatpush.bf16.msra.mxu0 %v970
    %1424 = vmatpush.bf16.msra.mxu0 %v966
    %1425 = vmatpush.bf16.msra.mxu0 %v962
    %1426 = vmatpush.bf16.msra.mxu0 %v958
    %1427 = vmatmul.bf16.gmra.mxu0 %v183
    %v1428 = vpop.f32.mrf.mxu0
    %v1429 = vadd.f32 0.0, %v1428
    %v1430 = vpop.f32.mrf.mxu0
    %1431 = vdwg.mxu0
    %1432 = vmatpush.bf16.msra.mxu0 %v1018
    %1433 = vmatpush.bf16.msra.mxu0 %v1014
    %1434 = vmatpush.bf16.msra.mxu0 %v1010
    %1435 = vmatpush.bf16.msra.mxu0 %v1006
    %1436 = vmatpush.bf16.msra.mxu0 %v1002
    %1437 = vmatpush.bf16.msra.mxu0 %v998
    %1438 = vmatpush.bf16.msra.mxu0 %v994
    %1439 = vmatpush.bf16.msra.mxu0 %v990
    %1440 = vmatmul.bf16.gmra.mxu0 %v184
    %v1441 = vpop.f32.mrf.mxu0
    %v1442 = vadd.f32 %v1429, %v1441
    %v1443 = vpop.f32.mrf.mxu0
    %1444 = vdwg.mxu0
    %1445 = vmatpush.bf16.msra.mxu0 %v1050
    %1446 = vmatpush.bf16.msra.mxu0 %v1046
    %1447 = vmatpush.bf16.msra.mxu0 %v1042
    %1448 = vmatpush.bf16.msra.mxu0 %v1038
    %1449 = vmatpush.bf16.msra.mxu0 %v1034
    %1450 = vmatpush.bf16.msra.mxu0 %v1030
    %1451 = vmatpush.bf16.msra.mxu0 %v1026
    %1452 = vmatpush.bf16.msra.mxu0 %v1022
    %1453 = vmatmul.bf16.gmra.mxu0 %v185
    %v1454 = vpop.f32.mrf.mxu0
    %v1455 = vadd.f32 %v1442, %v1454
    %v1456 = vpop.f32.mrf.mxu0
    %1457 = vdwg.mxu0
    %1458 = vmatpush.bf16.msra.mxu0 %v1082
    %1459 = vmatpush.bf16.msra.mxu0 %v1078
    %1460 = vmatpush.bf16.msra.mxu0 %v1074
    %1461 = vmatpush.bf16.msra.mxu0 %v1070
    %1462 = vmatpush.bf16.msra.mxu0 %v1066
    %1463 = vmatpush.bf16.msra.mxu0 %v1062
    %1464 = vmatpush.bf16.msra.mxu0 %v1058
    %1465 = vmatpush.bf16.msra.mxu0 %v1054
    %1466 = vmatmul.bf16.gmra.mxu0 %v186
    %v1467 = vpop.f32.mrf.mxu0
    %v1468 = vadd.f32 %v1455, %v1467
    %v1469 = vpop.f32.mrf.mxu0
    %1470 = vdwg.mxu0
    %1471 = vmatpush.bf16.msra.mxu0 %v1114
    %1472 = vmatpush.bf16.msra.mxu0 %v1110
    %1473 = vmatpush.bf16.msra.mxu0 %v1106
    %1474 = vmatpush.bf16.msra.mxu0 %v1102
    %1475 = vmatpush.bf16.msra.mxu0 %v1098
    %1476 = vmatpush.bf16.msra.mxu0 %v1094
    %1477 = vmatpush.bf16.msra.mxu0 %v1090
    %1478 = vmatpush.bf16.msra.mxu0 %v1086
    %1479 = vmatmul.bf16.gmra.mxu0 %v187
    %v1480 = vpop.f32.mrf.mxu0
    %v1481 = vadd.f32 %v1468, %v1480
    %v1482 = vpop.f32.mrf.mxu0
    %1483 = vdwg.mxu0
    %1484 = vmatpush.bf16.msra.mxu0 %v1146
    %1485 = vmatpush.bf16.msra.mxu0 %v1142
    %1486 = vmatpush.bf16.msra.mxu0 %v1138
    %1487 = vmatpush.bf16.msra.mxu0 %v1134
    %1488 = vmatpush.bf16.msra.mxu0 %v1130
    %1489 = vmatpush.bf16.msra.mxu0 %v1126
    %1490 = vmatpush.bf16.msra.mxu0 %v1122
    %1491 = vmatpush.bf16.msra.mxu0 %v1118
    %1492 = vmatmul.bf16.gmra.mxu0 %v188
    %v1493 = vpop.f32.mrf.mxu0
    %v1494 = vadd.f32 %v1481, %v1493
    %v1495 = vpop.f32.mrf.mxu0
    %1496 = vdwg.mxu0
    %1497 = vmatpush.bf16.msra.mxu0 %v987
    %1498 = vmatpush.bf16.msra.mxu0 %v983
    %1499 = vmatpush.bf16.msra.mxu0 %v979
    %1500 = vmatpush.bf16.msra.mxu0 %v975
    %1501 = vmatpush.bf16.msra.mxu0 %v971
    %1502 = vmatpush.bf16.msra.mxu0 %v967
    %1503 = vmatpush.bf16.msra.mxu0 %v963
    %1504 = vmatpush.bf16.msra.mxu0 %v959
    %1505 = vmatmul.bf16.gmra.mxu0 %v183
    %v1506 = vpop.f32.mrf.mxu0
    %v1507 = vadd.f32 0.0, %v1506
    %v1508 = vpop.f32.mrf.mxu0
    %1509 = vdwg.mxu0
    %1510 = vmatpush.bf16.msra.mxu0 %v1019
    %1511 = vmatpush.bf16.msra.mxu0 %v1015
    %1512 = vmatpush.bf16.msra.mxu0 %v1011
    %1513 = vmatpush.bf16.msra.mxu0 %v1007
    %1514 = vmatpush.bf16.msra.mxu0 %v1003
    %1515 = vmatpush.bf16.msra.mxu0 %v999
    %1516 = vmatpush.bf16.msra.mxu0 %v995
    %1517 = vmatpush.bf16.msra.mxu0 %v991
    %1518 = vmatmul.bf16.gmra.mxu0 %v184
    %v1519 = vpop.f32.mrf.mxu0
    %v1520 = vadd.f32 %v1507, %v1519
    %v1521 = vpop.f32.mrf.mxu0
    %1522 = vdwg.mxu0
    %1523 = vmatpush.bf16.msra.mxu0 %v1051
    %1524 = vmatpush.bf16.msra.mxu0 %v1047
    %1525 = vmatpush.bf16.msra.mxu0 %v1043
    %1526 = vmatpush.bf16.msra.mxu0 %v1039
    %1527 = vmatpush.bf16.msra.mxu0 %v1035
    %1528 = vmatpush.bf16.msra.mxu0 %v1031
    %1529 = vmatpush.bf16.msra.mxu0 %v1027
    %1530 = vmatpush.bf16.msra.mxu0 %v1023
    %1531 = vmatmul.bf16.gmra.mxu0 %v185
    %v1532 = vpop.f32.mrf.mxu0
    %v1533 = vadd.f32 %v1520, %v1532
    %v1534 = vpop.f32.mrf.mxu0
    %1535 = vdwg.mxu0
    %1536 = vmatpush.bf16.msra.mxu0 %v1083
    %1537 = vmatpush.bf16.msra.mxu0 %v1079
    %1538 = vmatpush.bf16.msra.mxu0 %v1075
    %1539 = vmatpush.bf16.msra.mxu0 %v1071
    %1540 = vmatpush.bf16.msra.mxu0 %v1067
    %1541 = vmatpush.bf16.msra.mxu0 %v1063
    %1542 = vmatpush.bf16.msra.mxu0 %v1059
    %1543 = vmatpush.bf16.msra.mxu0 %v1055
    %1544 = vmatmul.bf16.gmra.mxu0 %v186
    %v1545 = vpop.f32.mrf.mxu0
    %v1546 = vadd.f32 %v1533, %v1545
    %v1547 = vpop.f32.mrf.mxu0
    %1548 = vdwg.mxu0
    %1549 = vmatpush.bf16.msra.mxu0 %v1115
    %1550 = vmatpush.bf16.msra.mxu0 %v1111
    %1551 = vmatpush.bf16.msra.mxu0 %v1107
    %1552 = vmatpush.bf16.msra.mxu0 %v1103
    %1553 = vmatpush.bf16.msra.mxu0 %v1099
    %1554 = vmatpush.bf16.msra.mxu0 %v1095
    %1555 = vmatpush.bf16.msra.mxu0 %v1091
    %1556 = vmatpush.bf16.msra.mxu0 %v1087
    %1557 = vmatmul.bf16.gmra.mxu0 %v187
    %v1558 = vpop.f32.mrf.mxu0
    %v1559 = vadd.f32 %v1546, %v1558
    %v1560 = vpop.f32.mrf.mxu0
    %1561 = vdwg.mxu0
    %1562 = vmatpush.bf16.msra.mxu0 %v1147
    %1563 = vmatpush.bf16.msra.mxu0 %v1143
    %1564 = vmatpush.bf16.msra.mxu0 %v1139
    %1565 = vmatpush.bf16.msra.mxu0 %v1135
    %1566 = vmatpush.bf16.msra.mxu0 %v1131
    %1567 = vmatpush.bf16.msra.mxu0 %v1127
    %1568 = vmatpush.bf16.msra.mxu0 %v1123
    %1569 = vmatpush.bf16.msra.mxu0 %v1119
    %1570 = vmatmul.bf16.gmra.mxu0 %v188
    %v1571 = vpop.f32.mrf.mxu0
    %v1572 = vadd.f32 %v1559, %v1571
    %v1573 = vpop.f32.mrf.mxu0
    %1574 = vdwg.mxu0
    %1575 = vmatpush.bf16.msra.mxu0 %v988
    %1576 = vmatpush.bf16.msra.mxu0 %v984
    %1577 = vmatpush.bf16.msra.mxu0 %v980
    %1578 = vmatpush.bf16.msra.mxu0 %v976
    %1579 = vmatpush.bf16.msra.mxu0 %v972
    %1580 = vmatpush.bf16.msra.mxu0 %v968
    %1581 = vmatpush.bf16.msra.mxu0 %v964
    %1582 = vmatpush.bf16.msra.mxu0 %v960
    %1583 = vmatmul.bf16.gmra.mxu0 %v183
    %v1584 = vpop.f32.mrf.mxu0
    %v1585 = vadd.f32 0.0, %v1584
    %v1586 = vpop.f32.mrf.mxu0
    %1587 = vdwg.mxu0
    %1588 = vmatpush.bf16.msra.mxu0 %v1020
    %1589 = vmatpush.bf16.msra.mxu0 %v1016
    %1590 = vmatpush.bf16.msra.mxu0 %v1012
    %1591 = vmatpush.bf16.msra.mxu0 %v1008
    %1592 = vmatpush.bf16.msra.mxu0 %v1004
    %1593 = vmatpush.bf16.msra.mxu0 %v1000
    %1594 = vmatpush.bf16.msra.mxu0 %v996
    %1595 = vmatpush.bf16.msra.mxu0 %v992
    %1596 = vmatmul.bf16.gmra.mxu0 %v184
    %v1597 = vpop.f32.mrf.mxu0
    %v1598 = vadd.f32 %v1585, %v1597
    %v1599 = vpop.f32.mrf.mxu0
    %1600 = vdwg.mxu0
    %1601 = vmatpush.bf16.msra.mxu0 %v1052
    %1602 = vmatpush.bf16.msra.mxu0 %v1048
    %1603 = vmatpush.bf16.msra.mxu0 %v1044
    %1604 = vmatpush.bf16.msra.mxu0 %v1040
    %1605 = vmatpush.bf16.msra.mxu0 %v1036
    %1606 = vmatpush.bf16.msra.mxu0 %v1032
    %1607 = vmatpush.bf16.msra.mxu0 %v1028
    %1608 = vmatpush.bf16.msra.mxu0 %v1024
    %1609 = vmatmul.bf16.gmra.mxu0 %v185
    %v1610 = vpop.f32.mrf.mxu0
    %v1611 = vadd.f32 %v1598, %v1610
    %v1612 = vpop.f32.mrf.mxu0
    %1613 = vdwg.mxu0
    %1614 = vmatpush.bf16.msra.mxu0 %v1084
    %1615 = vmatpush.bf16.msra.mxu0 %v1080
    %1616 = vmatpush.bf16.msra.mxu0 %v1076
    %1617 = vmatpush.bf16.msra.mxu0 %v1072
    %1618 = vmatpush.bf16.msra.mxu0 %v1068
    %1619 = vmatpush.bf16.msra.mxu0 %v1064
    %1620 = vmatpush.bf16.msra.mxu0 %v1060
    %1621 = vmatpush.bf16.msra.mxu0 %v1056
    %1622 = vmatmul.bf16.gmra.mxu0 %v186
    %v1623 = vpop.f32.mrf.mxu0
    %v1624 = vadd.f32 %v1611, %v1623
    %v1625 = vpop.f32.mrf.mxu0
    %1626 = vdwg.mxu0
    %1627 = vmatpush.bf16.msra.mxu0 %v1116
    %1628 = vmatpush.bf16.msra.mxu0 %v1112
    %1629 = vmatpush.bf16.msra.mxu0 %v1108
    %1630 = vmatpush.bf16.msra.mxu0 %v1104
    %1631 = vmatpush.bf16.msra.mxu0 %v1100
    %1632 = vmatpush.bf16.msra.mxu0 %v1096
    %1633 = vmatpush.bf16.msra.mxu0 %v1092
    %1634 = vmatpush.bf16.msra.mxu0 %v1088
    %1635 = vmatmul.bf16.gmra.mxu0 %v187
    %v1636 = vpop.f32.mrf.mxu0
    %v1637 = vadd.f32 %v1624, %v1636
    %v1638 = vpop.f32.mrf.mxu0
    %1639 = vdwg.mxu0
    %1640 = vmatpush.bf16.msra.mxu0 %v1148
    %1641 = vmatpush.bf16.msra.mxu0 %v1144
    %1642 = vmatpush.bf16.msra.mxu0 %v1140
    %1643 = vmatpush.bf16.msra.mxu0 %v1136
    %1644 = vmatpush.bf16.msra.mxu0 %v1132
    %1645 = vmatpush.bf16.msra.mxu0 %v1128
    %1646 = vmatpush.bf16.msra.mxu0 %v1124
    %1647 = vmatpush.bf16.msra.mxu0 %v1120
    %1648 = vmatmul.bf16.gmra.mxu0 %v188
    %v1649 = vpop.f32.mrf.mxu0
    %v1650 = vadd.f32 %v1637, %v1649
    %v1651 = vpop.f32.mrf.mxu0
    %1652 = vdwg.mxu0
    %v1653 = vstv %s167
    %v1654 = vmul.f32 %v1416, %v1653
    %v1655 = vmul.f32 %v1494, %v1653
    %v1656 = vmul.f32 %v1572, %v1653
    %v1657 = vmul.f32 %v1650, %v1653
    %v1658 = vld [vmem:[#allocation7] sm:$0xf]
    %v1660 = vperm.slane %v1658, 0
    %v1661 = vperm.slane %v1658, 1
    %v1662 = vperm.slane %v1658, 2
    %v1663 = vperm.slane %v1658, 3
    %v1668 = vadd.f32 %v1654, %v1660
    %v1669 = vadd.f32 %v1655, %v1661
    %v1670 = vadd.f32 %v1656, %v1662
    %v1671 = vadd.f32 %v1657, %v1663
    %v1672 = vpack.c.bf16 %v1668, %v1668
    %v1673 = vpack.c.bf16 %v1669, %v1669
    %v1674 = vpack.c.bf16 %v1670, %v1670
    %v1675 = vpack.c.bf16 %v1671, %v1671
    %v1676 = vld [vmem:[#allocation8] sm:$0xff]
    %v1677 = vld [vmem:[#allocation8 + $0x8] sm:$0xff]
    %v1678 = vld [vmem:[#allocation8 + $0x10] sm:$0xff]
    %v1679 = vld [vmem:[#allocation8 + $0x18] sm:$0xff]
    %v1680 = vld [vmem:[#allocation8 + $0x20] sm:$0xff]
    %v1681 = vld [vmem:[#allocation8 + $0x28] sm:$0xff]
    %v1682 = vld [vmem:[#allocation8 + $0x30] sm:$0xff]
    %v1683 = vld [vmem:[#allocation8 + $0x38] sm:$0xff]
    %v1684 = vld [vmem:[#allocation8 + $0x40] sm:$0xff]
    %v1685 = vld [vmem:[#allocation8 + $0x48] sm:$0xff]
    %v1686 = vld [vmem:[#allocation8 + $0x50] sm:$0xff]
    %v1687 = vld [vmem:[#allocation8 + $0x58] sm:$0xff]
    %v1688 = vld [vmem:[#allocation8 + $0x60] sm:$0xff]
    %v1689 = vld [vmem:[#allocation8 + $0x68] sm:$0xff]
    %v1690 = vld [vmem:[#allocation8 + $0x70] sm:$0xff]
    %v1691 = vld [vmem:[#allocation8 + $0x78] sm:$0xff]
    %v1692 = vld [vmem:[#allocation8 + $0x80] sm:$0xff]
    %v1693 = vld [vmem:[#allocation8 + $0x88] sm:$0xff]
    %v1694 = vld [vmem:[#allocation8 + $0x90] sm:$0xff]
    %v1695 = vld [vmem:[#allocation8 + $0x98] sm:$0xff]
    %v1696 = vld [vmem:[#allocation8 + $0xa0] sm:$0xff]
    %v1697 = vld [vmem:[#allocation8 + $0xa8] sm:$0xff]
    %v1698 = vld [vmem:[#allocation8 + $0xb0] sm:$0xff]
    %v1699 = vld [vmem:[#allocation8 + $0xb8] sm:$0xff]
    %v1700 = vld [vmem:[#allocation8 + $0xc0] sm:$0xff]
    %v1701 = vld [vmem:[#allocation8 + $0xc8] sm:$0xff]
    %v1702 = vld [vmem:[#allocation8 + $0xd0] sm:$0xff]
    %v1703 = vld [vmem:[#allocation8 + $0xd8] sm:$0xff]
    %v1704 = vld [vmem:[#allocation8 + $0xe0] sm:$0xff]
    %v1705 = vld [vmem:[#allocation8 + $0xe8] sm:$0xff]
    %v1706 = vld [vmem:[#allocation8 + $0xf0] sm:$0xff]
    %v1707 = vld [vmem:[#allocation8 + $0xf8] sm:$0xff]
    %v1708 = vld [vmem:[#allocation8 + $0x100] sm:$0xff]
    %v1709 = vld [vmem:[#allocation8 + $0x108] sm:$0xff]
    %v1710 = vld [vmem:[#allocation8 + $0x110] sm:$0xff]
    %v1711 = vld [vmem:[#allocation8 + $0x118] sm:$0xff]
    %v1712 = vld [vmem:[#allocation8 + $0x120] sm:$0xff]
    %v1713 = vld [vmem:[#allocation8 + $0x128] sm:$0xff]
    %v1714 = vld [vmem:[#allocation8 + $0x130] sm:$0xff]
    %v1715 = vld [vmem:[#allocation8 + $0x138] sm:$0xff]
    %v1716 = vld [vmem:[#allocation8 + $0x140] sm:$0xff]
    %v1717 = vld [vmem:[#allocation8 + $0x148] sm:$0xff]
    %v1718 = vld [vmem:[#allocation8 + $0x150] sm:$0xff]
    %v1719 = vld [vmem:[#allocation8 + $0x158] sm:$0xff]
    %v1720 = vld [vmem:[#allocation8 + $0x160] sm:$0xff]
    %v1721 = vld [vmem:[#allocation8 + $0x168] sm:$0xff]
    %v1722 = vld [vmem:[#allocation8 + $0x170] sm:$0xff]
    %v1723 = vld [vmem:[#allocation8 + $0x178] sm:$0xff]
    %v1724 = vld [vmem:[#allocation8 + $0x180] sm:$0xff]
    %v1725 = vld [vmem:[#allocation8 + $0x188] sm:$0xff]
    %v1726 = vld [vmem:[#allocation8 + $0x190] sm:$0xff]
    %v1727 = vld [vmem:[#allocation8 + $0x198] sm:$0xff]
    %v1728 = vld [vmem:[#allocation8 + $0x1a0] sm:$0xff]
    %v1729 = vld [vmem:[#allocation8 + $0x1a8] sm:$0xff]
    %v1730 = vld [vmem:[#allocation8 + $0x1b0] sm:$0xff]
    %v1731 = vld [vmem:[#allocation8 + $0x1b8] sm:$0xff]
    %v1732 = vld [vmem:[#allocation8 + $0x1c0] sm:$0xff]
    %v1733 = vld [vmem:[#allocation8 + $0x1c8] sm:$0xff]
    %v1734 = vld [vmem:[#allocation8 + $0x1d0] sm:$0xff]
    %v1735 = vld [vmem:[#allocation8 + $0x1d8] sm:$0xff]
    %v1736 = vld [vmem:[#allocation8 + $0x1e0] sm:$0xff]
    %v1737 = vld [vmem:[#allocation8 + $0x1e8] sm:$0xff]
    %v1738 = vld [vmem:[#allocation8 + $0x1f0] sm:$0xff]
    %v1739 = vld [vmem:[#allocation8 + $0x1f8] sm:$0xff]
    %v1740 = vld [vmem:[%s4] sm:$0x3]
    %v1742 = vperm.slane %v1740, 0
    %v1743 = vperm.slane %v1740, 1
    %v1810 = vunpack.c.l.b16 %v1676
    %v1811 = vunpack.c.h.b16 %v1676
    %v1812 = vunpack.c.l.b16 %v1677
    %v1813 = vunpack.c.h.b16 %v1677
    %v1814 = vunpack.c.l.b16 %v1678
    %v1815 = vunpack.c.h.b16 %v1678
    %v1816 = vunpack.c.l.b16 %v1679
    %v1817 = vunpack.c.h.b16 %v1679
    %v1818 = vunpack.c.l.b16 %v1680
    %v1819 = vunpack.c.h.b16 %v1680
    %v1820 = vunpack.c.l.b16 %v1681
    %v1821 = vunpack.c.h.b16 %v1681
    %v1822 = vunpack.c.l.b16 %v1682
    %v1823 = vunpack.c.h.b16 %v1682
    %v1824 = vunpack.c.l.b16 %v1683
    %v1825 = vunpack.c.h.b16 %v1683
    %v1826 = vunpack.c.l.b16 %v1684
    %v1827 = vunpack.c.h.b16 %v1684
    %v1828 = vunpack.c.l.b16 %v1685
    %v1829 = vunpack.c.h.b16 %v1685
    %v1830 = vunpack.c.l.b16 %v1686
    %v1831 = vunpack.c.h.b16 %v1686
    %v1832 = vunpack.c.l.b16 %v1687
    %v1833 = vunpack.c.h.b16 %v1687
    %v1834 = vunpack.c.l.b16 %v1688
    %v1835 = vunpack.c.h.b16 %v1688
    %v1836 = vunpack.c.l.b16 %v1689
    %v1837 = vunpack.c.h.b16 %v1689
    %v1838 = vunpack.c.l.b16 %v1690
    %v1839 = vunpack.c.h.b16 %v1690
    %v1840 = vunpack.c.l.b16 %v1691
    %v1841 = vunpack.c.h.b16 %v1691
    %v1842 = vunpack.c.l.b16 %v1692
    %v1843 = vunpack.c.h.b16 %v1692
    %v1844 = vunpack.c.l.b16 %v1693
    %v1845 = vunpack.c.h.b16 %v1693
    %v1846 = vunpack.c.l.b16 %v1694
    %v1847 = vunpack.c.h.b16 %v1694
    %v1848 = vunpack.c.l.b16 %v1695
    %v1849 = vunpack.c.h.b16 %v1695
    %v1850 = vunpack.c.l.b16 %v1696
    %v1851 = vunpack.c.h.b16 %v1696
    %v1852 = vunpack.c.l.b16 %v1697
    %v1853 = vunpack.c.h.b16 %v1697
    %v1854 = vunpack.c.l.b16 %v1698
    %v1855 = vunpack.c.h.b16 %v1698
    %v1856 = vunpack.c.l.b16 %v1699
    %v1857 = vunpack.c.h.b16 %v1699
    %v1858 = vunpack.c.l.b16 %v1700
    %v1859 = vunpack.c.h.b16 %v1700
    %v1860 = vunpack.c.l.b16 %v1701
    %v1861 = vunpack.c.h.b16 %v1701
    %v1862 = vunpack.c.l.b16 %v1702
    %v1863 = vunpack.c.h.b16 %v1702
    %v1864 = vunpack.c.l.b16 %v1703
    %v1865 = vunpack.c.h.b16 %v1703
    %v1866 = vunpack.c.l.b16 %v1704
    %v1867 = vunpack.c.h.b16 %v1704
    %v1868 = vunpack.c.l.b16 %v1705
    %v1869 = vunpack.c.h.b16 %v1705
    %v1870 = vunpack.c.l.b16 %v1706
    %v1871 = vunpack.c.h.b16 %v1706
    %v1872 = vunpack.c.l.b16 %v1707
    %v1873 = vunpack.c.h.b16 %v1707
    %v1874 = vunpack.c.l.b16 %v1708
    %v1875 = vunpack.c.h.b16 %v1708
    %v1876 = vunpack.c.l.b16 %v1709
    %v1877 = vunpack.c.h.b16 %v1709
    %v1878 = vunpack.c.l.b16 %v1710
    %v1879 = vunpack.c.h.b16 %v1710
    %v1880 = vunpack.c.l.b16 %v1711
    %v1881 = vunpack.c.h.b16 %v1711
    %v1882 = vunpack.c.l.b16 %v1712
    %v1883 = vunpack.c.h.b16 %v1712
    %v1884 = vunpack.c.l.b16 %v1713
    %v1885 = vunpack.c.h.b16 %v1713
    %v1886 = vunpack.c.l.b16 %v1714
    %v1887 = vunpack.c.h.b16 %v1714
    %v1888 = vunpack.c.l.b16 %v1715
    %v1889 = vunpack.c.h.b16 %v1715
    %v1890 = vunpack.c.l.b16 %v1716
    %v1891 = vunpack.c.h.b16 %v1716
    %v1892 = vunpack.c.l.b16 %v1717
    %v1893 = vunpack.c.h.b16 %v1717
    %v1894 = vunpack.c.l.b16 %v1718
    %v1895 = vunpack.c.h.b16 %v1718
    %v1896 = vunpack.c.l.b16 %v1719
    %v1897 = vunpack.c.h.b16 %v1719
    %v1898 = vunpack.c.l.b16 %v1720
    %v1899 = vunpack.c.h.b16 %v1720
    %v1900 = vunpack.c.l.b16 %v1721
    %v1901 = vunpack.c.h.b16 %v1721
    %v1902 = vunpack.c.l.b16 %v1722
    %v1903 = vunpack.c.h.b16 %v1722
    %v1904 = vunpack.c.l.b16 %v1723
    %v1905 = vunpack.c.h.b16 %v1723
    %v1906 = vunpack.c.l.b16 %v1724
    %v1907 = vunpack.c.h.b16 %v1724
    %v1908 = vunpack.c.l.b16 %v1725
    %v1909 = vunpack.c.h.b16 %v1725
    %v1910 = vunpack.c.l.b16 %v1726
    %v1911 = vunpack.c.h.b16 %v1726
    %v1912 = vunpack.c.l.b16 %v1727
    %v1913 = vunpack.c.h.b16 %v1727
    %v1914 = vunpack.c.l.b16 %v1728
    %v1915 = vunpack.c.h.b16 %v1728
    %v1916 = vunpack.c.l.b16 %v1729
    %v1917 = vunpack.c.h.b16 %v1729
    %v1918 = vunpack.c.l.b16 %v1730
    %v1919 = vunpack.c.h.b16 %v1730
    %v1920 = vunpack.c.l.b16 %v1731
    %v1921 = vunpack.c.h.b16 %v1731
    %v1922 = vunpack.c.l.b16 %v1732
    %v1923 = vunpack.c.h.b16 %v1732
    %v1924 = vunpack.c.l.b16 %v1733
    %v1925 = vunpack.c.h.b16 %v1733
    %v1926 = vunpack.c.l.b16 %v1734
    %v1927 = vunpack.c.h.b16 %v1734
    %v1928 = vunpack.c.l.b16 %v1735
    %v1929 = vunpack.c.h.b16 %v1735
    %v1930 = vunpack.c.l.b16 %v1736
    %v1931 = vunpack.c.h.b16 %v1736
    %v1932 = vunpack.c.l.b16 %v1737
    %v1933 = vunpack.c.h.b16 %v1737
    %v1934 = vunpack.c.l.b16 %v1738
    %v1935 = vunpack.c.h.b16 %v1738
    %v1936 = vunpack.c.l.b16 %v1739
    %v1937 = vunpack.c.h.b16 %v1739
    %v1938 = vpack.c.b16 %v1812, %v1810
    %v1939 = vpack.c.b16 %v1813, %v1811
    %v1940 = vpack.c.b16 %v1816, %v1814
    %v1941 = vpack.c.b16 %v1817, %v1815
    %v1942 = vpack.c.b16 %v1820, %v1818
    %v1943 = vpack.c.b16 %v1821, %v1819
    %v1944 = vpack.c.b16 %v1824, %v1822
    %v1945 = vpack.c.b16 %v1825, %v1823
    %v1946 = vpack.c.b16 %v1828, %v1826
    %v1947 = vpack.c.b16 %v1829, %v1827
    %v1948 = vpack.c.b16 %v1832, %v1830
    %v1949 = vpack.c.b16 %v1833, %v1831
    %v1950 = vpack.c.b16 %v1836, %v1834
    %v1951 = vpack.c.b16 %v1837, %v1835
    %v1952 = vpack.c.b16 %v1840, %v1838
    %v1953 = vpack.c.b16 %v1841, %v1839
    %v1954 = vpack.c.b16 %v1844, %v1842
    %v1955 = vpack.c.b16 %v1845, %v1843
    %v1956 = vpack.c.b16 %v1848, %v1846
    %v1957 = vpack.c.b16 %v1849, %v1847
    %v1958 = vpack.c.b16 %v1852, %v1850
    %v1959 = vpack.c.b16 %v1853, %v1851
    %v1960 = vpack.c.b16 %v1856, %v1854
    %v1961 = vpack.c.b16 %v1857, %v1855
    %v1962 = vpack.c.b16 %v1860, %v1858
    %v1963 = vpack.c.b16 %v1861, %v1859
    %v1964 = vpack.c.b16 %v1864, %v1862
    %v1965 = vpack.c.b16 %v1865, %v1863
    %v1966 = vpack.c.b16 %v1868, %v1866
    %v1967 = vpack.c.b16 %v1869, %v1867
    %v1968 = vpack.c.b16 %v1872, %v1870
    %v1969 = vpack.c.b16 %v1873, %v1871
    %v1970 = vpack.c.b16 %v1876, %v1874
    %v1971 = vpack.c.b16 %v1877, %v1875
    %v1972 = vpack.c.b16 %v1880, %v1878
    %v1973 = vpack.c.b16 %v1881, %v1879
    %v1974 = vpack.c.b16 %v1884, %v1882
    %v1975 = vpack.c.b16 %v1885, %v1883
    %v1976 = vpack.c.b16 %v1888, %v1886
    %v1977 = vpack.c.b16 %v1889, %v1887
    %v1978 = vpack.c.b16 %v1892, %v1890
    %v1979 = vpack.c.b16 %v1893, %v1891
    %v1980 = vpack.c.b16 %v1896, %v1894
    %v1981 = vpack.c.b16 %v1897, %v1895
    %v1982 = vpack.c.b16 %v1900, %v1898
    %v1983 = vpack.c.b16 %v1901, %v1899
    %v1984 = vpack.c.b16 %v1904, %v1902
    %v1985 = vpack.c.b16 %v1905, %v1903
    %v1986 = vpack.c.b16 %v1908, %v1906
    %v1987 = vpack.c.b16 %v1909, %v1907
    %v1988 = vpack.c.b16 %v1912, %v1910
    %v1989 = vpack.c.b16 %v1913, %v1911
    %v1990 = vpack.c.b16 %v1916, %v1914
    %v1991 = vpack.c.b16 %v1917, %v1915
    %v1992 = vpack.c.b16 %v1920, %v1918
    %v1993 = vpack.c.b16 %v1921, %v1919
    %v1994 = vpack.c.b16 %v1924, %v1922
    %v1995 = vpack.c.b16 %v1925, %v1923
    %v1996 = vpack.c.b16 %v1928, %v1926
    %v1997 = vpack.c.b16 %v1929, %v1927
    %v1998 = vpack.c.b16 %v1932, %v1930
    %v1999 = vpack.c.b16 %v1933, %v1931
    %v2000 = vpack.c.b16 %v1936, %v1934
    %v2001 = vpack.c.b16 %v1937, %v1935
    %2066 = vmatpush.bf16.msra.mxu0 %v1952
    %2067 = vmatpush.bf16.msra.mxu0 %v1950
    %2068 = vmatpush.bf16.msra.mxu0 %v1948
    %2069 = vmatpush.bf16.msra.mxu0 %v1946
    %2070 = vmatpush.bf16.msra.mxu0 %v1944
    %2071 = vmatpush.bf16.msra.mxu0 %v1942
    %2072 = vmatpush.bf16.msra.mxu0 %v1940
    %2073 = vmatpush.bf16.msra.mxu0 %v1938
    %2074 = vmatmul.bf16.gmra.mxu0 %v1672
    %v2075 = vpop.f32.mrf.mxu0
    %v2076 = vadd.f32 %v1742, %v2075
    %v2077 = vpop.f32.mrf.mxu0
    %2078 = vdwg.mxu0
    %2079 = vmatpush.bf16.msra.mxu0 %v1968
    %2080 = vmatpush.bf16.msra.mxu0 %v1966
    %2081 = vmatpush.bf16.msra.mxu0 %v1964
    %2082 = vmatpush.bf16.msra.mxu0 %v1962
    %2083 = vmatpush.bf16.msra.mxu0 %v1960
    %2084 = vmatpush.bf16.msra.mxu0 %v1958
    %2085 = vmatpush.bf16.msra.mxu0 %v1956
    %2086 = vmatpush.bf16.msra.mxu0 %v1954
    %2087 = vmatmul.bf16.gmra.mxu0 %v1673
    %v2088 = vpop.f32.mrf.mxu0
    %v2089 = vadd.f32 %v2076, %v2088
    %v2090 = vpop.f32.mrf.mxu0
    %2091 = vdwg.mxu0
    %2092 = vmatpush.bf16.msra.mxu0 %v1984
    %2093 = vmatpush.bf16.msra.mxu0 %v1982
    %2094 = vmatpush.bf16.msra.mxu0 %v1980
    %2095 = vmatpush.bf16.msra.mxu0 %v1978
    %2096 = vmatpush.bf16.msra.mxu0 %v1976
    %2097 = vmatpush.bf16.msra.mxu0 %v1974
    %2098 = vmatpush.bf16.msra.mxu0 %v1972
    %2099 = vmatpush.bf16.msra.mxu0 %v1970
    %2100 = vmatmul.bf16.gmra.mxu0 %v1674
    %v2101 = vpop.f32.mrf.mxu0
    %v2102 = vadd.f32 %v2089, %v2101
    %v2103 = vpop.f32.mrf.mxu0
    %2104 = vdwg.mxu0
    %2105 = vmatpush.bf16.msra.mxu0 %v2000
    %2106 = vmatpush.bf16.msra.mxu0 %v1998
    %2107 = vmatpush.bf16.msra.mxu0 %v1996
    %2108 = vmatpush.bf16.msra.mxu0 %v1994
    %2109 = vmatpush.bf16.msra.mxu0 %v1992
    %2110 = vmatpush.bf16.msra.mxu0 %v1990
    %2111 = vmatpush.bf16.msra.mxu0 %v1988
    %2112 = vmatpush.bf16.msra.mxu0 %v1986
    %2113 = vmatmul.bf16.gmra.mxu0 %v1675
    %v2114 = vpop.f32.mrf.mxu0
    %v2115 = vadd.f32 %v2102, %v2114
    %v2116 = vpop.f32.mrf.mxu0
    %2117 = vdwg.mxu0
    %2118 = vmatpush.bf16.msra.mxu0 %v1953
    %2119 = vmatpush.bf16.msra.mxu0 %v1951
    %2120 = vmatpush.bf16.msra.mxu0 %v1949
    %2121 = vmatpush.bf16.msra.mxu0 %v1947
    %2122 = vmatpush.bf16.msra.mxu0 %v1945
    %2123 = vmatpush.bf16.msra.mxu0 %v1943
    %2124 = vmatpush.bf16.msra.mxu0 %v1941
    %2125 = vmatpush.bf16.msra.mxu0 %v1939
    %2126 = vmatmul.bf16.gmra.mxu0 %v1672
    %v2127 = vpop.f32.mrf.mxu0
    %v2128 = vadd.f32 %v1743, %v2127
    %v2129 = vpop.f32.mrf.mxu0
    %2130 = vdwg.mxu0
    %2131 = vmatpush.bf16.msra.mxu0 %v1969
    %2132 = vmatpush.bf16.msra.mxu0 %v1967
    %2133 = vmatpush.bf16.msra.mxu0 %v1965
    %2134 = vmatpush.bf16.msra.mxu0 %v1963
    %2135 = vmatpush.bf16.msra.mxu0 %v1961
    %2136 = vmatpush.bf16.msra.mxu0 %v1959
    %2137 = vmatpush.bf16.msra.mxu0 %v1957
    %2138 = vmatpush.bf16.msra.mxu0 %v1955
    %2139 = vmatmul.bf16.gmra.mxu0 %v1673
    %v2140 = vpop.f32.mrf.mxu0
    %v2141 = vadd.f32 %v2128, %v2140
    %v2142 = vpop.f32.mrf.mxu0
    %2143 = vdwg.mxu0
    %2144 = vmatpush.bf16.msra.mxu0 %v1985
    %2145 = vmatpush.bf16.msra.mxu0 %v1983
    %2146 = vmatpush.bf16.msra.mxu0 %v1981
    %2147 = vmatpush.bf16.msra.mxu0 %v1979
    %2148 = vmatpush.bf16.msra.mxu0 %v1977
    %2149 = vmatpush.bf16.msra.mxu0 %v1975
    %2150 = vmatpush.bf16.msra.mxu0 %v1973
    %2151 = vmatpush.bf16.msra.mxu0 %v1971
    %2152 = vmatmul.bf16.gmra.mxu0 %v1674
    %v2153 = vpop.f32.mrf.mxu0
    %v2154 = vadd.f32 %v2141, %v2153
    %v2155 = vpop.f32.mrf.mxu0
    %2156 = vdwg.mxu0
    %2157 = vmatpush.bf16.msra.mxu0 %v2001
    %2158 = vmatpush.bf16.msra.mxu0 %v1999
    %2159 = vmatpush.bf16.msra.mxu0 %v1997
    %2160 = vmatpush.bf16.msra.mxu0 %v1995
    %2161 = vmatpush.bf16.msra.mxu0 %v1993
    %2162 = vmatpush.bf16.msra.mxu0 %v1991
    %2163 = vmatpush.bf16.msra.mxu0 %v1989
    %2164 = vmatpush.bf16.msra.mxu0 %v1987
    %2165 = vmatmul.bf16.gmra.mxu0 %v1675
    %v2166 = vpop.f32.mrf.mxu0
    %v2167 = vadd.f32 %v2154, %v2166
    %v2168 = vpop.f32.mrf.mxu0
    %2169 = vdwg.mxu0
    %v2170 = vpack.c.bf16 %v2115, %v2115
    %v2171 = vpack.c.bf16 %v2167, %v2167
    %v2172 = vld [vmem:[#allocation10] sm:$0xff]
    %v2173 = vld [vmem:[#allocation10 + $0x8] sm:$0xff]
    %v2174 = vld [vmem:[#allocation10 + $0x10] sm:$0xff]
    %v2175 = vld [vmem:[#allocation10 + $0x18] sm:$0xff]
    %v2176 = vld [vmem:[#allocation10 + $0x20] sm:$0xff]
    %v2177 = vld [vmem:[#allocation10 + $0x28] sm:$0xff]
    %v2178 = vld [vmem:[#allocation10 + $0x30] sm:$0xff]
    %v2179 = vld [vmem:[#allocation10 + $0x38] sm:$0xff]
    %v2180 = vld [vmem:[#allocation10 + $0x40] sm:$0xff]
    %v2181 = vld [vmem:[#allocation10 + $0x48] sm:$0xff]
    %v2182 = vld [vmem:[#allocation10 + $0x50] sm:$0xff]
    %v2183 = vld [vmem:[#allocation10 + $0x58] sm:$0xff]
    %v2184 = vld [vmem:[#allocation10 + $0x60] sm:$0xff]
    %v2185 = vld [vmem:[#allocation10 + $0x68] sm:$0xff]
    %v2186 = vld [vmem:[#allocation10 + $0x70] sm:$0xff]
    %v2187 = vld [vmem:[#allocation10 + $0x78] sm:$0xff]
    %v2188 = vld [vmem:[#allocation10 + $0x80] sm:$0xff]
    %v2189 = vld [vmem:[#allocation10 + $0x88] sm:$0xff]
    %v2190 = vld [vmem:[#allocation10 + $0x90] sm:$0xff]
    %v2191 = vld [vmem:[#allocation10 + $0x98] sm:$0xff]
    %v2192 = vld [vmem:[#allocation10 + $0xa0] sm:$0xff]
    %v2193 = vld [vmem:[#allocation10 + $0xa8] sm:$0xff]
    %v2194 = vld [vmem:[#allocation10 + $0xb0] sm:$0xff]
    %v2195 = vld [vmem:[#allocation10 + $0xb8] sm:$0xff]
    %v2196 = vld [vmem:[#allocation10 + $0xc0] sm:$0xff]
    %v2197 = vld [vmem:[#allocation10 + $0xc8] sm:$0xff]
    %v2198 = vld [vmem:[#allocation10 + $0xd0] sm:$0xff]
    %v2199 = vld [vmem:[#allocation10 + $0xd8] sm:$0xff]
    %v2200 = vld [vmem:[#allocation10 + $0xe0] sm:$0xff]
    %v2201 = vld [vmem:[#allocation10 + $0xe8] sm:$0xff]
    %v2202 = vld [vmem:[#allocation10 + $0xf0] sm:$0xff]
    %v2203 = vld [vmem:[#allocation10 + $0xf8] sm:$0xff]
    %v2204 = vld [vmem:[%s6] sm:$0x3]
    %v2206 = vperm.slane %v2204, 0
    %v2207 = vperm.slane %v2204, 1
    %v2242 = vunpack.c.l.b16 %v2172
    %v2243 = vunpack.c.h.b16 %v2172
    %v2244 = vunpack.c.l.b16 %v2173
    %v2245 = vunpack.c.h.b16 %v2173
    %v2246 = vunpack.c.l.b16 %v2174
    %v2247 = vunpack.c.h.b16 %v2174
    %v2248 = vunpack.c.l.b16 %v2175
    %v2249 = vunpack.c.h.b16 %v2175
    %v2250 = vunpack.c.l.b16 %v2176
    %v2251 = vunpack.c.h.b16 %v2176
    %v2252 = vunpack.c.l.b16 %v2177
    %v2253 = vunpack.c.h.b16 %v2177
    %v2254 = vunpack.c.l.b16 %v2178
    %v2255 = vunpack.c.h.b16 %v2178
    %v2256 = vunpack.c.l.b16 %v2179
    %v2257 = vunpack.c.h.b16 %v2179
    %v2258 = vunpack.c.l.b16 %v2180
    %v2259 = vunpack.c.h.b16 %v2180
    %v2260 = vunpack.c.l.b16 %v2181
    %v2261 = vunpack.c.h.b16 %v2181
    %v2262 = vunpack.c.l.b16 %v2182
    %v2263 = vunpack.c.h.b16 %v2182
    %v2264 = vunpack.c.l.b16 %v2183
    %v2265 = vunpack.c.h.b16 %v2183
    %v2266 = vunpack.c.l.b16 %v2184
    %v2267 = vunpack.c.h.b16 %v2184
    %v2268 = vunpack.c.l.b16 %v2185
    %v2269 = vunpack.c.h.b16 %v2185
    %v2270 = vunpack.c.l.b16 %v2186
    %v2271 = vunpack.c.h.b16 %v2186
    %v2272 = vunpack.c.l.b16 %v2187
    %v2273 = vunpack.c.h.b16 %v2187
    %v2274 = vunpack.c.l.b16 %v2188
    %v2275 = vunpack.c.h.b16 %v2188
    %v2276 = vunpack.c.l.b16 %v2189
    %v2277 = vunpack.c.h.b16 %v2189
    %v2278 = vunpack.c.l.b16 %v2190
    %v2279 = vunpack.c.h.b16 %v2190
    %v2280 = vunpack.c.l.b16 %v2191
    %v2281 = vunpack.c.h.b16 %v2191
    %v2282 = vunpack.c.l.b16 %v2192
    %v2283 = vunpack.c.h.b16 %v2192
    %v2284 = vunpack.c.l.b16 %v2193
    %v2285 = vunpack.c.h.b16 %v2193
    %v2286 = vunpack.c.l.b16 %v2194
    %v2287 = vunpack.c.h.b16 %v2194
    %v2288 = vunpack.c.l.b16 %v2195
    %v2289 = vunpack.c.h.b16 %v2195
    %v2290 = vunpack.c.l.b16 %v2196
    %v2291 = vunpack.c.h.b16 %v2196
    %v2292 = vunpack.c.l.b16 %v2197
    %v2293 = vunpack.c.h.b16 %v2197
    %v2294 = vunpack.c.l.b16 %v2198
    %v2295 = vunpack.c.h.b16 %v2198
    %v2296 = vunpack.c.l.b16 %v2199
    %v2297 = vunpack.c.h.b16 %v2199
    %v2298 = vunpack.c.l.b16 %v2200
    %v2299 = vunpack.c.h.b16 %v2200
    %v2300 = vunpack.c.l.b16 %v2201
    %v2301 = vunpack.c.h.b16 %v2201
    %v2302 = vunpack.c.l.b16 %v2202
    %v2303 = vunpack.c.h.b16 %v2202
    %v2304 = vunpack.c.l.b16 %v2203
    %v2305 = vunpack.c.h.b16 %v2203
    %v2306 = vpack.c.b16 %v2244, %v2242
    %v2307 = vpack.c.b16 %v2245, %v2243
    %v2308 = vpack.c.b16 %v2248, %v2246
    %v2309 = vpack.c.b16 %v2249, %v2247
    %v2310 = vpack.c.b16 %v2252, %v2250
    %v2311 = vpack.c.b16 %v2253, %v2251
    %v2312 = vpack.c.b16 %v2256, %v2254
    %v2313 = vpack.c.b16 %v2257, %v2255
    %v2314 = vpack.c.b16 %v2260, %v2258
    %v2315 = vpack.c.b16 %v2261, %v2259
    %v2316 = vpack.c.b16 %v2264, %v2262
    %v2317 = vpack.c.b16 %v2265, %v2263
    %v2318 = vpack.c.b16 %v2268, %v2266
    %v2319 = vpack.c.b16 %v2269, %v2267
    %v2320 = vpack.c.b16 %v2272, %v2270
    %v2321 = vpack.c.b16 %v2273, %v2271
    %v2322 = vpack.c.b16 %v2276, %v2274
    %v2323 = vpack.c.b16 %v2277, %v2275
    %v2324 = vpack.c.b16 %v2280, %v2278
    %v2325 = vpack.c.b16 %v2281, %v2279
    %v2326 = vpack.c.b16 %v2284, %v2282
    %v2327 = vpack.c.b16 %v2285, %v2283
    %v2328 = vpack.c.b16 %v2288, %v2286
    %v2329 = vpack.c.b16 %v2289, %v2287
    %v2330 = vpack.c.b16 %v2292, %v2290
    %v2331 = vpack.c.b16 %v2293, %v2291
    %v2332 = vpack.c.b16 %v2296, %v2294
    %v2333 = vpack.c.b16 %v2297, %v2295
    %v2334 = vpack.c.b16 %v2300, %v2298
    %v2335 = vpack.c.b16 %v2301, %v2299
    %v2336 = vpack.c.b16 %v2304, %v2302
    %v2337 = vpack.c.b16 %v2305, %v2303
    %2370 = vmatpush.bf16.msra.mxu0 %v2320
    %2371 = vmatpush.bf16.msra.mxu0 %v2318
    %2372 = vmatpush.bf16.msra.mxu0 %v2316
    %2373 = vmatpush.bf16.msra.mxu0 %v2314
    %2374 = vmatpush.bf16.msra.mxu0 %v2312
    %2375 = vmatpush.bf16.msra.mxu0 %v2310
    %2376 = vmatpush.bf16.msra.mxu0 %v2308
    %2377 = vmatpush.bf16.msra.mxu0 %v2306
    %2378 = vmatmul.bf16.gmra.mxu0 %v2170
    %v2379 = vpop.f32.mrf.mxu0
    %v2380 = vadd.f32 %v2206, %v2379
    %v2381 = vpop.f32.mrf.mxu0
    %2382 = vdwg.mxu0
    %2383 = vmatpush.bf16.msra.mxu0 %v2336
    %2384 = vmatpush.bf16.msra.mxu0 %v2334
    %2385 = vmatpush.bf16.msra.mxu0 %v2332
    %2386 = vmatpush.bf16.msra.mxu0 %v2330
    %2387 = vmatpush.bf16.msra.mxu0 %v2328
    %2388 = vmatpush.bf16.msra.mxu0 %v2326
    %2389 = vmatpush.bf16.msra.mxu0 %v2324
    %2390 = vmatpush.bf16.msra.mxu0 %v2322
    %2391 = vmatmul.bf16.gmra.mxu0 %v2171
    %v2392 = vpop.f32.mrf.mxu0
    %v2393 = vadd.f32 %v2380, %v2392
    %v2394 = vpop.f32.mrf.mxu0
    %2395 = vdwg.mxu0
    %2396 = vmatpush.bf16.msra.mxu0 %v2321
    %2397 = vmatpush.bf16.msra.mxu0 %v2319
    %2398 = vmatpush.bf16.msra.mxu0 %v2317
    %2399 = vmatpush.bf16.msra.mxu0 %v2315
    %2400 = vmatpush.bf16.msra.mxu0 %v2313
    %2401 = vmatpush.bf16.msra.mxu0 %v2311
    %2402 = vmatpush.bf16.msra.mxu0 %v2309
    %2403 = vmatpush.bf16.msra.mxu0 %v2307
    %2404 = vmatmul.bf16.gmra.mxu0 %v2170
    %v2405 = vpop.f32.mrf.mxu0
    %v2406 = vadd.f32 %v2207, %v2405
    %v2407 = vpop.f32.mrf.mxu0
    %2408 = vdwg.mxu0
    %2409 = vmatpush.bf16.msra.mxu0 %v2337
    %2410 = vmatpush.bf16.msra.mxu0 %v2335
    %2411 = vmatpush.bf16.msra.mxu0 %v2333
    %2412 = vmatpush.bf16.msra.mxu0 %v2331
    %2413 = vmatpush.bf16.msra.mxu0 %v2329
    %2414 = vmatpush.bf16.msra.mxu0 %v2327
    %2415 = vmatpush.bf16.msra.mxu0 %v2325
    %2416 = vmatpush.bf16.msra.mxu0 %v2323
    %2417 = vmatmul.bf16.gmra.mxu0 %v2171
    %v2418 = vpop.f32.mrf.mxu0
    %v2419 = vadd.f32 %v2406, %v2418
    %v2420 = vpop.f32.mrf.mxu0
    %2421 = vdwg.mxu0
    %v2422 = vtanh.pop %v2393
    %v2423 = vtanh.pop %v2419
    %v2426 = vrot.slane %v2423, 6
    %v2427 = vsel %vm145, %v2422, %v2426
    %2429 = vst [vmem:[#allocation13] sm:$0xf] %v2427
    %v2430 = vpack.c.bf16 %v2422, %v2422
    %v2431 = vpack.c.bf16 %v2423, %v2423
    %v2432 = vld [vmem:[#allocation11] sm:$0xf]
    %v2433 = vld [vmem:[#allocation11 + $0x4] sm:$0xf]
    %v2434 = vld [vmem:[#allocation11 + $0x8] sm:$0xf]
    %v2435 = vld [vmem:[#allocation11 + $0xc] sm:$0xf]
    %v2436 = vld [vmem:[#allocation11 + $0x10] sm:$0xf]
    %v2437 = vld [vmem:[#allocation11 + $0x14] sm:$0xf]
    %v2438 = vld [vmem:[#allocation11 + $0x18] sm:$0xf]
    %v2439 = vld [vmem:[#allocation11 + $0x1c] sm:$0xf]
    %v2440 = vld [vmem:[#allocation11 + $0x20] sm:$0xf]
    %v2441 = vld [vmem:[#allocation11 + $0x24] sm:$0xf]
    %v2442 = vld [vmem:[#allocation11 + $0x28] sm:$0xf]
    %v2443 = vld [vmem:[#allocation11 + $0x2c] sm:$0xf]
    %v2444 = vld [vmem:[#allocation11 + $0x30] sm:$0xf]
    %v2445 = vld [vmem:[#allocation11 + $0x34] sm:$0xf]
    %v2446 = vld [vmem:[#allocation11 + $0x38] sm:$0xf]
    %v2447 = vld [vmem:[#allocation11 + $0x3c] sm:$0xf]
    %v2448 = vld [vmem:[#allocation11 + $0x40] sm:$0xf]
    %v2449 = vld [vmem:[#allocation11 + $0x44] sm:$0xf]
    %v2450 = vld [vmem:[#allocation11 + $0x48] sm:$0xf]
    %v2451 = vld [vmem:[#allocation11 + $0x4c] sm:$0xf]
    %v2452 = vld [vmem:[#allocation11 + $0x50] sm:$0xf]
    %v2453 = vld [vmem:[#allocation11 + $0x54] sm:$0xf]
    %v2454 = vld [vmem:[#allocation11 + $0x58] sm:$0xf]
    %v2455 = vld [vmem:[#allocation11 + $0x5c] sm:$0xf]
    %v2456 = vld [vmem:[#allocation11 + $0x60] sm:$0xf]
    %v2457 = vld [vmem:[#allocation11 + $0x64] sm:$0xf]
    %v2458 = vld [vmem:[#allocation11 + $0x68] sm:$0xf]
    %v2459 = vld [vmem:[#allocation11 + $0x6c] sm:$0xf]
    %v2460 = vld [vmem:[#allocation11 + $0x70] sm:$0xf]
    %v2461 = vld [vmem:[#allocation11 + $0x74] sm:$0xf]
    %v2462 = vld [vmem:[#allocation11 + $0x78] sm:$0xf]
    %v2463 = vld [vmem:[#allocation11 + $0x7c] sm:$0xf]
    %v2464 = vld [vmem:[%s8] sm:$0x1]
    %v2466 = vperm.slane %v2464, 0
    %v2500 = vunpack.c.l.b16 %v2432
    %v2501 = vunpack.c.l.b16 %v2433
    %v2502 = vunpack.c.l.b16 %v2434
    %v2503 = vunpack.c.l.b16 %v2435
    %v2504 = vunpack.c.l.b16 %v2436
    %v2505 = vunpack.c.l.b16 %v2437
    %v2506 = vunpack.c.l.b16 %v2438
    %v2507 = vunpack.c.l.b16 %v2439
    %v2508 = vunpack.c.l.b16 %v2440
    %v2509 = vunpack.c.l.b16 %v2441
    %v2510 = vunpack.c.l.b16 %v2442
    %v2511 = vunpack.c.l.b16 %v2443
    %v2512 = vunpack.c.l.b16 %v2444
    %v2513 = vunpack.c.l.b16 %v2445
    %v2514 = vunpack.c.l.b16 %v2446
    %v2515 = vunpack.c.l.b16 %v2447
    %v2516 = vunpack.c.l.b16 %v2448
    %v2517 = vunpack.c.l.b16 %v2449
    %v2518 = vunpack.c.l.b16 %v2450
    %v2519 = vunpack.c.l.b16 %v2451
    %v2520 = vunpack.c.l.b16 %v2452
    %v2521 = vunpack.c.l.b16 %v2453
    %v2522 = vunpack.c.l.b16 %v2454
    %v2523 = vunpack.c.l.b16 %v2455
    %v2524 = vunpack.c.l.b16 %v2456
    %v2525 = vunpack.c.l.b16 %v2457
    %v2526 = vunpack.c.l.b16 %v2458
    %v2527 = vunpack.c.l.b16 %v2459
    %v2528 = vunpack.c.l.b16 %v2460
    %v2529 = vunpack.c.l.b16 %v2461
    %v2530 = vunpack.c.l.b16 %v2462
    %v2531 = vunpack.c.l.b16 %v2463
    %v2532 = vpack.c.b16 %v2501, %v2500
    %v2533 = vpack.c.b16 %v2503, %v2502
    %v2534 = vpack.c.b16 %v2505, %v2504
    %v2535 = vpack.c.b16 %v2507, %v2506
    %v2536 = vpack.c.b16 %v2509, %v2508
    %v2537 = vpack.c.b16 %v2511, %v2510
    %v2538 = vpack.c.b16 %v2513, %v2512
    %v2539 = vpack.c.b16 %v2515, %v2514
    %v2540 = vpack.c.b16 %v2517, %v2516
    %v2541 = vpack.c.b16 %v2519, %v2518
    %v2542 = vpack.c.b16 %v2521, %v2520
    %v2543 = vpack.c.b16 %v2523, %v2522
    %v2544 = vpack.c.b16 %v2525, %v2524
    %v2545 = vpack.c.b16 %v2527, %v2526
    %v2546 = vpack.c.b16 %v2529, %v2528
    %v2547 = vpack.c.b16 %v2531, %v2530
    %2564 = vmatpush.bf16.msra.mxu0 %v2539
    %2565 = vmatpush.bf16.msra.mxu0 %v2538
    %2566 = vmatpush.bf16.msra.mxu0 %v2537
    %2567 = vmatpush.bf16.msra.mxu0 %v2536
    %2568 = vmatpush.bf16.msra.mxu0 %v2535
    %2569 = vmatpush.bf16.msra.mxu0 %v2534
    %2570 = vmatpush.bf16.msra.mxu0 %v2533
    %2571 = vmatpush.bf16.msra.mxu0 %v2532
    %2572 = vmatmul.bf16.gmra.mxu0 %v2430
    %v2573 = vpop.f32.mrf.mxu0
    %v2574 = vadd.f32 %v2466, %v2573
    %v2575 = vpop.f32.mrf.mxu0
    %2576 = vdwg.mxu0
    %2577 = vmatpush.bf16.msra.mxu0 %v2547
    %2578 = vmatpush.bf16.msra.mxu0 %v2546
    %2579 = vmatpush.bf16.msra.mxu0 %v2545
    %2580 = vmatpush.bf16.msra.mxu0 %v2544
    %2581 = vmatpush.bf16.msra.mxu0 %v2543
    %2582 = vmatpush.bf16.msra.mxu0 %v2542
    %2583 = vmatpush.bf16.msra.mxu0 %v2541
    %2584 = vmatpush.bf16.msra.mxu0 %v2540
    %2585 = vmatmul.bf16.gmra.mxu0 %v2431
    %v2586 = vpop.f32.mrf.mxu0
    %v2587 = vadd.f32 %v2574, %v2586
    %v2588 = vpop.f32.mrf.mxu0
    %2589 = vdwg.mxu0
    %2590 = vst [vmem:[#allocation14] sm:$0x3] %v2587
    // Predicated region
    $region62: #{tpu_custom_call.1} parent=1 // pred_check
      _
    $region63: #{tpu_custom_call.1} parent=1 // pred_check_branch
      %2592 = sbr.rel (0) target = $region65
    $region64: #{tpu_custom_call.1} parent=1 // pred_region
      %2594 = vsyncadd [#allocation4], 0
      %s2596 = sshll.u32 [#allocation13], 4
      %s2597 = int_to_ptr.vmem [resolvable:$true] %s2596
      %s2598 = sshll.u32 %s9, 4
      %s2599 = int_to_ptr.hbm [resolvable:$true] %s2598
      %2601 = dma.vmem_to_hbm [thread:$0]  %s2597, 64, %s2599, [#allocation4]
    $region65: #{tpu_custom_call.1} parent=1 // pred_fallthru
      _
    // Predicated region
    $region66: #{tpu_custom_call.1} parent=1 // pred_check
      _
    $region67: #{tpu_custom_call.1} parent=1 // pred_check_branch
      %2603 = sbr.rel (0) target = $region69
    $region68: #{tpu_custom_call.1} parent=1 // pred_region
      %2605 = vsyncadd [#allocation15], 0
      %s2607 = sshll.u32 [#allocation14], 4
      %s2608 = int_to_ptr.vmem [resolvable:$true] %s2607
      %s2609 = sshll.u32 %s10, 4
      %s2610 = int_to_ptr.hbm [resolvable:$true] %s2609
      %2612 = dma.vmem_to_hbm [thread:$0]  %s2608, 32, %s2610, [#allocation15]
    $region69: #{tpu_custom_call.1} parent=1 // pred_fallthru
      _
    // Predicated region
    $region70: #{tpu_custom_call.1} parent=1 // pred_check
      _
    $region71: #{tpu_custom_call.1} parent=1 // pred_check_branch
      %2614 = sbr.rel (0) target = $region73
    $region72: #{tpu_custom_call.1} parent=1 // pred_region
      %2616 = dma.done [#allocation4], 64
    $region73: #{tpu_custom_call.1} parent=1 // pred_fallthru
      _
    // Predicated region
    $region74: #{tpu_custom_call.1} parent=1 // pred_check
      _
    $region75: #{tpu_custom_call.1} parent=1 // pred_check_branch
      %2618 = sbr.rel (0) target = $region77
    $region76: #{tpu_custom_call.1} parent=1 // pred_region
      %2620 = dma.done [#allocation15], 32
    $region77: #{tpu_custom_call.1} parent=1 // pred_fallthru
      _
    %2621 = vsyncpa [#allocation3], 1
    %2622 = vsyncpa [#allocation6], 1
    %2623 = vsyncpa [#allocation9], 1
    %2624 = vsyncpa [#allocation12], 1
    %2625 = vsyncpa [#allocation4], 1
    %2626 = vsyncpa [#allocation15], 1

</llo_original>
